<compile_context>
chip_gen: v7x
topology: tpu7x:2x2x1
jax: 0.10.0
libtpu: 0.0.40
codegen_flags: <defaults>
</compile_context>

<pallas_src>
import functools

import numpy as np
import jax
import jax.numpy as jnp
from jax.experimental import pallas as pl
from jax.experimental.pallas import tpu as pltpu

LOG2 = float(np.log(2.0))
VMEM_LIMIT = 48 * 1024 * 1024  # fits v5e/v6e (128 MiB) and v7x (64 MiB) comfortably


def _round_up(x: int, m: int) -> int:
    return ((x + m - 1) // m) * m


def _choose_tile(n: int, tile_req: int, min_steps: int = 1):
    """Pick a row tile (multiple of 16) and the padded extent it tiles exactly."""
    steps = max(pl.cdiv(n, max(tile_req, 1)), min_steps)
    tile = _round_up(pl.cdiv(n, steps), 16)
    return tile, _round_up(n, tile)


def _ssp(x):
    # shifted softplus: log(1 + exp(x)) - log(2), numerically stable, f32
    return jnp.maximum(x, 0.0) + jnp.log1p(jnp.exp(-jnp.abs(x))) - LOG2


# --------------------------------------------------------------------------- #
# Kernel 1: fused message function.                                            #
#   layer 1: two bf16 dots (zero-extended weights) accumulated into one hidden #
#   layer 2: one block-diagonal bf16 dot producing [msgs || gates]             #
# --------------------------------------------------------------------------- #
def _message_kernel(nodes_ref, edge_ref, dist_ref,
                    w1n_ref, w1e_ref, b1_ref, w2_ref, b2_ref,
                    out_ref, *, shift, node_size):
    xn = nodes_ref[...]                                   # [TE, in_n] bf16
    xe = edge_ref[...].astype(jnp.bfloat16)               # [TE, in_e]

    h = (jnp.dot(xn, w1n_ref[...], preferred_element_type=jnp.float32)
         + jnp.dot(xe, w1e_ref[...], preferred_element_type=jnp.float32)
         + b1_ref[...])                                   # [TE, hid] f32
    h = _ssp(h)

    y = (jnp.dot(h.astype(jnp.bfloat16), w2_ref[...],
                 preferred_element_type=jnp.float32)
         + b2_ref[...])                                   # [TE, 2*out] f32

    msgs = y[:, :node_size]
    gates = y[:, node_size:]

    d = dist_ref[...]                                     # [TE, 1] f32
    cutoff = 1.0 - jax.nn.sigmoid(5.0 * (d - shift))      # broadcasts over lanes

    out_ref[...] = (msgs * gates * cutoff).astype(out_ref.dtype)


def _compute_messages(nodes_bf16, edge_state, edge_distance, params,
                      node_size, hard_cutoff, tile_e):
    E, in_n = nodes_bf16.shape
    in_e = edge_state.shape[1]
    w1n, w1e = params["msg_w1_node"], params["msg_w1_edge"]
    b1, w2, b2 = params["msg_b1"], params["msg_w2"], params["msg_b2"]
    hid = w1n.shape[1]
    out2 = w2.shape[1]                                    # 2 * node_size

    kernel = functools.partial(_message_kernel,
                               shift=float(hard_cutoff) - 1.5,
                               node_size=node_size)

    return pl.pallas_call(
        kernel,
        out_shape=jax.ShapeDtypeStruct((E, node_size), jnp.float32),
        grid=(E // tile_e,),
        in_specs=[
            pl.BlockSpec((tile_e, in_n), lambda i: (i, 0)),   # gathered senders (bf16)
            pl.BlockSpec((tile_e, in_e), lambda i: (i, 0)),   # edge features (f32)
            pl.BlockSpec((tile_e, 1), lambda i: (i, 0)),      # edge distance (f32)
            pl.BlockSpec((in_n, hid), lambda i: (0, 0)),      # W1 node branch (bf16)
            pl.BlockSpec((in_e, hid), lambda i: (0, 0)),      # W1 edge branch (bf16)
            pl.BlockSpec((1, hid), lambda i: (0, 0)),         # b1 (f32)
            pl.BlockSpec((hid, out2), lambda i: (0, 0)),      # W2 block-diag (bf16)
            pl.BlockSpec((1, out2), lambda i: (0, 0)),        # b2 (f32)
        ],
        out_specs=pl.BlockSpec((tile_e, node_size), lambda i: (i, 0)),
        compiler_params=pltpu.CompilerParams(
            dimension_semantics=("parallel",),
            vmem_limit_bytes=VMEM_LIMIT),
    )(nodes_bf16, edge_state, edge_distance, w1n, w1e, b1, w2, b2)


# --------------------------------------------------------------------------- #
# Kernel 2: state transition + residual over nodes.                            #
# --------------------------------------------------------------------------- #
def _state_kernel(node_ref, msum_ref, w1_ref, b1_ref, w2_ref, b2_ref, out_ref):
    m = msum_ref[...].astype(jnp.bfloat16)
    h = _ssp(jnp.dot(m, w1_ref[...], preferred_element_type=jnp.float32)
             + b1_ref[...])
    t = (jnp.dot(h.astype(jnp.bfloat16), w2_ref[...],
                 preferred_element_type=jnp.float32) + b2_ref[...])
    out_ref[...] = (node_ref[...].astype(jnp.float32) + t).astype(out_ref.dtype)


def _state_transition(node_state, message_sum, w1, b1, w2, b2, tile_n):
    N, F = node_state.shape
    tile_n, n_pad = _choose_tile(N, tile_n, min_steps=1)
    pad = n_pad - N
    if pad:
        node_state_p = jnp.pad(node_state, ((0, pad), (0, 0)))
        message_sum = jnp.pad(message_sum, ((0, pad), (0, 0)))
    else:
        node_state_p = node_state

    out = pl.pallas_call(
        _state_kernel,
        out_shape=jax.ShapeDtypeStruct((n_pad, F), node_state.dtype),
        grid=(n_pad // tile_n,),
        in_specs=[
            pl.BlockSpec((tile_n, F), lambda i: (i, 0)),
            pl.BlockSpec((tile_n, F), lambda i: (i, 0)),
            pl.BlockSpec((F, F), lambda i: (0, 0)),
            pl.BlockSpec((1, F), lambda i: (0, 0)),
            pl.BlockSpec((F, F), lambda i: (0, 0)),
            pl.BlockSpec((1, F), lambda i: (0, 0)),
        ],
        out_specs=pl.BlockSpec((tile_n, F), lambda i: (i, 0)),
        compiler_params=pltpu.CompilerParams(
            dimension_semantics=("parallel",),
            vmem_limit_bytes=VMEM_LIMIT),
    )(node_state_p, message_sum, w1, b1, w2, b2)

    return out[:N] if pad else out


# --------------------------------------------------------------------------- #
# Parameter packing: zero-extended layer-1 weights + block-diagonal layer 2.   #
# Weights stored as [in_features, out_features] (PyTorch W.T), biases [1,out]. #
# --------------------------------------------------------------------------- #
def pack_params(w1n, b1n, w2n, b2n, w1e, b1e, w2e, b2e,
                st_w1, st_b1, st_w2, st_b2, compute_dtype=jnp.bfloat16):
    in_n, hid_n = w1n.shape
    in_e, hid_e = w1e.shape
    out_n, out_e = w2n.shape[1], w2e.shape[1]
    hid = hid_n + hid_e

    w1n_ext = jnp.zeros((in_n, hid), jnp.float32).at[:, :hid_n].set(w1n)
    w1e_ext = jnp.zeros((in_e, hid), jnp.float32).at[:, hid_n:].set(w1e)
    w2p = jnp.zeros((hid, out_n + out_e), jnp.float32)
    w2p = w2p.at[:hid_n, :out_n].set(w2n).at[hid_n:, out_n:].set(w2e)

    return dict(
        msg_w1_node=w1n_ext.astype(compute_dtype),
        msg_w1_edge=w1e_ext.astype(compute_dtype),
        msg_b1=jnp.concatenate([b1n, b1e], axis=1),
        msg_w2=w2p.astype(compute_dtype),
        msg_b2=jnp.concatenate([b2n, b2e], axis=1),
        st_w1=st_w1.astype(compute_dtype), st_b1=st_b1,
        st_w2=st_w2.astype(compute_dtype), st_b2=st_b2,
    )


# --------------------------------------------------------------------------- #
# Full Interaction forward.                                                     #
# --------------------------------------------------------------------------- #
def interaction_forward(node_state, edges, edge_state, edges_distance, params,
                        hard_cutoff, include_receiver=False,
                        tile_e: int = 4096, tile_n: int = 1024):
    N, node_size = node_state.shape
    E = edges.shape[0]

    # >=2 grid steps so the v7x megacore can shard the "parallel" edge axis.
    tile_e, e_pad = _choose_tile(E, tile_e, min_steps=2)
    pad = e_pad - E

    senders = edges[:, 0]
    receivers = edges[:, 1]
    if pad:
        senders = jnp.pad(senders, (0, pad))                          # node 0 (valid)
        receivers = jnp.pad(receivers, (0, pad), constant_values=N)   # OOB -> dropped
        edge_state = jnp.pad(edge_state, ((0, pad), (0, 0)))
        edges_distance = jnp.pad(edges_distance, ((0, pad), (0, 0)))

    # TODO(synk): the sender gather and the receiver scatter-add (index_add_ with
    # duplicate indices) stay as XLA ops; a sorted segmented-sum fused into the
    # state kernel is the longer-term replacement.
    if include_receiver:
        gathered = jnp.concatenate(
            [jnp.take(node_state, senders, axis=0),
             jnp.take(node_state, receivers, axis=0)], axis=1)
    else:
        gathered = jnp.take(node_state, senders, axis=0)
    gathered = gathered.astype(jnp.bfloat16)   # fuses with the gather, halves the stream

    messages = _compute_messages(gathered, edge_state, edges_distance, params,
                                 node_size, hard_cutoff, tile_e)

    # Padded rows carry receiver index == N (out of bounds) and are dropped here,
    # so no out[:E] slice pass is needed.
    message_sum = jnp.zeros((N, node_size), jnp.float32).at[receivers].add(
        messages, mode="drop")

    return _state_transition(node_state, message_sum,
                             params["st_w1"], params["st_b1"],
                             params["st_w2"], params["st_b2"], tile_n)


# --------------------------------------------------------------------------- #
# Pure-JAX f32 reference (mirrors the PyTorch module exactly).                  #
# --------------------------------------------------------------------------- #
def _reference(node_state, edges, edge_state, edges_distance, raw, hard_cutoff,
               include_receiver=False):
    def ssp(x):
        return jax.nn.softplus(x) - LOG2

    if include_receiver:
        nodes_in = jnp.concatenate(
            [node_state[edges[:, 0]], node_state[edges[:, 1]]], axis=1)
    else:
        nodes_in = node_state[edges[:, 0]]

    gates = ssp(edge_state @ raw["w1e"] + raw["b1e"]) @ raw["w2e"] + raw["b2e"]
    gates = gates * (1.0 - jax.nn.sigmoid(
        5.0 * (edges_distance - (hard_cutoff - 1.5))))
    msgs = (ssp(nodes_in @ raw["w1n"] + raw["b1n"]) @ raw["w2n"] + raw["b2n"]) * gates

    msum = jnp.zeros_like(node_state).at[edges[:, 1]].add(msgs)
    new_state = node_state + (
        ssp(msum @ raw["st_w1"] + raw["st_b1"]) @ raw["st_w2"] + raw["st_b2"])
    return new_state


if __name__ == "__main__":
    NODE_SIZE = 32
    EDGE_SIZE = 16
    N_NODES = 64
    N_EDGES = 512
    CUTOFF = 5.0

    key = jax.random.PRNGKey(0)
    ks = jax.random.split(key, 20)

    node_state = jax.random.normal(ks[0], (N_NODES, NODE_SIZE), jnp.float32)
    edge_state = jax.random.normal(ks[1], (N_EDGES, EDGE_SIZE), jnp.float32)
    edges_distance = jax.random.uniform(ks[2], (N_EDGES, 1), jnp.float32, 0.5, 6.0)
    edges = jax.random.randint(ks[3], (N_EDGES, 2), 0, N_NODES, jnp.int32)

    def lin(kw, kb, fan_in, fan_out):
        # deterministic nn.Linear-like uniform init; weight stored as [in, out]
        bound = 1.0 / np.sqrt(fan_in)
        w = jax.random.uniform(kw, (fan_in, fan_out), jnp.float32, -bound, bound)
        b = jax.random.uniform(kb, (1, fan_out), jnp.float32, -bound, bound)
        return w, b

    # message function (include_receiver=False -> input_size == node_size)
    w1n, b1n = lin(ks[4], ks[5], NODE_SIZE, NODE_SIZE)     # Linear(in, in)
    w2n, b2n = lin(ks[6], ks[7], NODE_SIZE, NODE_SIZE)     # Linear(in, out)
    w1e, b1e = lin(ks[8], ks[9], EDGE_SIZE, NODE_SIZE)     # Linear(edge, out)
    w2e, b2e = lin(ks[10], ks[11], NODE_SIZE, NODE_SIZE)   # Linear(out, out)
    # state transition
    st_w1, st_b1 = lin(ks[12], ks[13], NODE_SIZE, NODE_SIZE)
    st_w2, st_b2 = lin(ks[14], ks[15], NODE_SIZE, NODE_SIZE)

    params = pack_params(w1n, b1n, w2n, b2n, w1e, b1e, w2e, b2e,
                         st_w1, st_b1, st_w2, st_b2)

    fwd = jax.jit(functools.partial(interaction_forward, hard_cutoff=CUTOFF))
    out = fwd(node_state, edges, edge_state, edges_distance, params)
    out = jax.block_until_ready(out)

    raw = dict(w1n=w1n, b1n=b1n, w2n=w2n, b2n=b2n,
               w1e=w1e, b1e=b1e, w2e=w2e, b2e=b2e,
               st_w1=st_w1, st_b1=st_b1, st_w2=st_w2, st_b2=st_b2)
    ref = _reference(node_state, edges, edge_state, edges_distance, raw, CUTOFF)

    # bf16 MXU operands (f32 accumulation) -> looser tolerance than a pure-f32 run.
    np.testing.assert_allclose(np.asarray(out), np.asarray(ref),
                               rtol=5e-2, atol=5e-2)

    print("KERNEL_OK")
</pallas_src>

<mosaic_0001>
module attributes {stable_mosaic.version = 11 : i64} {
  func.func @_message_kernel(%arg0: i32, %arg1: memref<256x32xbf16, #tpu.memory_space<vmem>>, %arg2: memref<256x16xf32, #tpu.memory_space<vmem>>, %arg3: memref<256x1xf32, #tpu.memory_space<vmem>>, %arg4: memref<32x64xbf16, #tpu.memory_space<vmem>>, %arg5: memref<16x64xbf16, #tpu.memory_space<vmem>>, %arg6: memref<1x64xf32, #tpu.memory_space<vmem>>, %arg7: memref<64x64xbf16, #tpu.memory_space<vmem>>, %arg8: memref<1x64xf32, #tpu.memory_space<vmem>>, %arg9: memref<256x32xf32, #tpu.memory_space<vmem>>) attributes {dimension_semantics = [#tpu.dimension_semantics<parallel>], iteration_bounds = array<i64: 2>, scalar_prefetch = 0 : i64, scratch_operands = 0 : i64, tpu.core_type = #tpu.core_type<tc>, window_params = [{transform_indices = @transform_0, window_bounds = array<i64: 256, 32>}, {transform_indices = @transform_1, window_bounds = array<i64: 256, 16>}, {transform_indices = @transform_2, window_bounds = array<i64: 256, 1>}, {pipeline_mode = #tpu.pipeline_mode<synchronous>, transform_indices = @transform_3, window_bounds = array<i64: 32, 64>}, {pipeline_mode = #tpu.pipeline_mode<synchronous>, transform_indices = @transform_4, window_bounds = array<i64: 16, 64>}, {pipeline_mode = #tpu.pipeline_mode<synchronous>, transform_indices = @transform_5, window_bounds = array<i64: 1, 64>}, {pipeline_mode = #tpu.pipeline_mode<synchronous>, transform_indices = @transform_6, window_bounds = array<i64: 64, 64>}, {pipeline_mode = #tpu.pipeline_mode<synchronous>, transform_indices = @transform_7, window_bounds = array<i64: 1, 64>}, {transform_indices = @transform_8, window_bounds = array<i64: 256, 32>}]} {
    %c0 = arith.constant 0 : index
    %c0_0 = arith.constant 0 : index
    %0 = vector.load %arg1[%c0, %c0_0] : memref<256x32xbf16, #tpu.memory_space<vmem>>, vector<256x32xbf16>
    %c0_1 = arith.constant 0 : index
    %c0_2 = arith.constant 0 : index
    %1 = vector.load %arg2[%c0_1, %c0_2] : memref<256x16xf32, #tpu.memory_space<vmem>>, vector<256x16xf32>
    %2 = arith.truncf %1 : vector<256x16xf32> to vector<256x16xbf16>
    %c0_3 = arith.constant 0 : index
    %c0_4 = arith.constant 0 : index
    %3 = vector.load %arg4[%c0_3, %c0_4] : memref<32x64xbf16, #tpu.memory_space<vmem>>, vector<32x64xbf16>
    %cst = arith.constant dense<0.000000e+00> : vector<256x64xf32>
    %4 = tpu.matmul %0, %3, %cst {dimension_numbers = #tpu.dot_dimension_numbers<[1], [0], [0], [1], [0, 0, 1, 1], [], []>} : vector<256x32xbf16>, vector<32x64xbf16>, vector<256x64xf32> -> vector<256x64xf32>
    %c0_5 = arith.constant 0 : index
    %c0_6 = arith.constant 0 : index
    %5 = vector.load %arg5[%c0_5, %c0_6] : memref<16x64xbf16, #tpu.memory_space<vmem>>, vector<16x64xbf16>
    %cst_7 = arith.constant dense<0.000000e+00> : vector<256x64xf32>
    %6 = tpu.matmul %2, %5, %cst_7 {dimension_numbers = #tpu.dot_dimension_numbers<[1], [0], [0], [1], [0, 0, 1, 1], [], []>} : vector<256x16xbf16>, vector<16x64xbf16>, vector<256x64xf32> -> vector<256x64xf32>
    %7 = arith.addf %4, %6 : vector<256x64xf32>
    %c0_8 = arith.constant 0 : index
    %c0_9 = arith.constant 0 : index
    %8 = vector.load %arg6[%c0_8, %c0_9] : memref<1x64xf32, #tpu.memory_space<vmem>>, vector<1x64xf32>
    %9 = vector.broadcast %8 : vector<1x64xf32> to vector<256x64xf32>
    %10 = arith.addf %7, %9 : vector<256x64xf32>
    %cst_10 = arith.constant 0.000000e+00 : f32
    %11 = vector.broadcast %cst_10 : f32 to vector<256x64xf32>
    %12 = arith.maximumf %10, %11 : vector<256x64xf32>
    %13 = math.absf %10 : vector<256x64xf32>
    %cst_11 = arith.constant 0.000000e+00 : f32
    %14 = vector.broadcast %cst_11 : f32 to vector<256x64xf32>
    %15 = arith.subf %14, %13 : vector<256x64xf32>
    %16 = math.exp %15 : vector<256x64xf32>
    %17 = math.log1p %16 : vector<256x64xf32>
    %18 = arith.addf %12, %17 : vector<256x64xf32>
    %cst_12 = arith.constant 0.693147182 : f32
    %19 = vector.broadcast %cst_12 : f32 to vector<256x64xf32>
    %20 = arith.subf %18, %19 : vector<256x64xf32>
    %21 = arith.truncf %20 : vector<256x64xf32> to vector<256x64xbf16>
    %c0_13 = arith.constant 0 : index
    %c0_14 = arith.constant 0 : index
    %22 = vector.load %arg7[%c0_13, %c0_14] : memref<64x64xbf16, #tpu.memory_space<vmem>>, vector<64x64xbf16>
    %cst_15 = arith.constant dense<0.000000e+00> : vector<256x64xf32>
    %23 = tpu.matmul %21, %22, %cst_15 {dimension_numbers = #tpu.dot_dimension_numbers<[1], [0], [0], [1], [0, 0, 1, 1], [], []>} : vector<256x64xbf16>, vector<64x64xbf16>, vector<256x64xf32> -> vector<256x64xf32>
    %c0_16 = arith.constant 0 : index
    %c0_17 = arith.constant 0 : index
    %24 = vector.load %arg8[%c0_16, %c0_17] : memref<1x64xf32, #tpu.memory_space<vmem>>, vector<1x64xf32>
    %25 = vector.broadcast %24 : vector<1x64xf32> to vector<256x64xf32>
    %26 = arith.addf %23, %25 : vector<256x64xf32>
    %27 = vector.extract_strided_slice %26 {offsets = [0, 0], sizes = [256, 32], strides = [1, 1]} : vector<256x64xf32> to vector<256x32xf32>
    %28 = vector.extract_strided_slice %26 {offsets = [0, 32], sizes = [256, 32], strides = [1, 1]} : vector<256x64xf32> to vector<256x32xf32>
    %c0_18 = arith.constant 0 : index
    %c0_19 = arith.constant 0 : index
    %29 = vector.load %arg3[%c0_18, %c0_19] : memref<256x1xf32, #tpu.memory_space<vmem>>, vector<256x1xf32>
    %cst_20 = arith.constant 3.500000e+00 : f32
    %30 = vector.broadcast %cst_20 : f32 to vector<256x1xf32>
    %31 = arith.subf %29, %30 : vector<256x1xf32>
    %cst_21 = arith.constant 5.000000e+00 : f32
    %32 = vector.broadcast %cst_21 : f32 to vector<256x1xf32>
    %33 = arith.mulf %32, %31 : vector<256x1xf32>
    %34 = arith.negf %33 : vector<256x1xf32>
    %35 = math.exp %34 : vector<256x1xf32>
    %cst_22 = arith.constant 1.000000e+00 : f32
    %36 = vector.broadcast %cst_22 : f32 to vector<256x1xf32>
    %37 = arith.addf %36, %35 : vector<256x1xf32>
    %38 = arith.divf %36, %37 : vector<256x1xf32>
    %cst_23 = arith.constant 1.000000e+00 : f32
    %39 = vector.broadcast %cst_23 : f32 to vector<256x1xf32>
    %40 = arith.subf %39, %38 : vector<256x1xf32>
    %41 = arith.mulf %27, %28 : vector<256x32xf32>
    %42 = vector.broadcast %40 : vector<256x1xf32> to vector<256x32xf32>
    %43 = arith.mulf %41, %42 : vector<256x32xf32>
    %c0_24 = arith.constant 0 : index
    %c0_25 = arith.constant 0 : index
    %44 = vector.load %arg9[%c0_24, %c0_25] : memref<256x32xf32, #tpu.memory_space<vmem>>, vector<256x32xf32>
    tpu.vector_store %arg9[%c0_24, %c0_25], %43 {strides = array<i32>} : memref<256x32xf32, #tpu.memory_space<vmem>>, vector<256x32xf32>,
    return
  }
  func.func @transform_0(%arg0: i32) -> (i32, i32) {
    %c0_i32 = arith.constant 0 : i32
    %c0_i32_0 = arith.constant 0 : i32
    return %arg0, %c0_i32 : i32, i32
  }
  func.func @transform_1(%arg0: i32) -> (i32, i32) {
    %c0_i32 = arith.constant 0 : i32
    %c0_i32_0 = arith.constant 0 : i32
    return %arg0, %c0_i32 : i32, i32
  }
  func.func @transform_2(%arg0: i32) -> (i32, i32) {
    %c0_i32 = arith.constant 0 : i32
    %c0_i32_0 = arith.constant 0 : i32
    return %arg0, %c0_i32 : i32, i32
  }
  func.func @transform_3(%arg0: i32) -> (i32, i32) {
    %c0_i32 = arith.constant 0 : i32
    %c0_i32_0 = arith.constant 0 : i32
    %c0_i32_1 = arith.constant 0 : i32
    return %c0_i32, %c0_i32_0 : i32, i32
  }
  func.func @transform_4(%arg0: i32) -> (i32, i32) {
    %c0_i32 = arith.constant 0 : i32
    %c0_i32_0 = arith.constant 0 : i32
    %c0_i32_1 = arith.constant 0 : i32
    return %c0_i32, %c0_i32_0 : i32, i32
  }
  func.func @transform_5(%arg0: i32) -> (i32, i32) {
    %c0_i32 = arith.constant 0 : i32
    %c0_i32_0 = arith.constant 0 : i32
    %c0_i32_1 = arith.constant 0 : i32
    return %c0_i32, %c0_i32_0 : i32, i32
  }
  func.func @transform_6(%arg0: i32) -> (i32, i32) {
    %c0_i32 = arith.constant 0 : i32
    %c0_i32_0 = arith.constant 0 : i32
    %c0_i32_1 = arith.constant 0 : i32
    return %c0_i32, %c0_i32_0 : i32, i32
  }
  func.func @transform_7(%arg0: i32) -> (i32, i32) {
    %c0_i32 = arith.constant 0 : i32
    %c0_i32_0 = arith.constant 0 : i32
    %c0_i32_1 = arith.constant 0 : i32
    return %c0_i32, %c0_i32_0 : i32, i32
  }
  func.func @transform_8(%arg0: i32) -> (i32, i32) {
    %c0_i32 = arith.constant 0 : i32
    %c0_i32_0 = arith.constant 0 : i32
    return %arg0, %c0_i32 : i32, i32
  }
}

module attributes {stable_mosaic.version = 11 : i64} {
  func.func @_state_kernel(%arg0: i32, %arg1: memref<64x32xf32, #tpu.memory_space<vmem>>, %arg2: memref<64x32xf32, #tpu.memory_space<vmem>>, %arg3: memref<32x32xbf16, #tpu.memory_space<vmem>>, %arg4: memref<1x32xf32, #tpu.memory_space<vmem>>, %arg5: memref<32x32xbf16, #tpu.memory_space<vmem>>, %arg6: memref<1x32xf32, #tpu.memory_space<vmem>>, %arg7: memref<64x32xf32, #tpu.memory_space<vmem>>) attributes {dimension_semantics = [#tpu.dimension_semantics<parallel>], iteration_bounds = array<i64: 1>, scalar_prefetch = 0 : i64, scratch_operands = 0 : i64, tpu.core_type = #tpu.core_type<tc>, window_params = [{transform_indices = @transform_0, window_bounds = array<i64: 64, 32>}, {transform_indices = @transform_1, window_bounds = array<i64: 64, 32>}, {pipeline_mode = #tpu.pipeline_mode<synchronous>, transform_indices = @transform_2, window_bounds = array<i64: 32, 32>}, {pipeline_mode = #tpu.pipeline_mode<synchronous>, transform_indices = @transform_3, window_bounds = array<i64: 1, 32>}, {pipeline_mode = #tpu.pipeline_mode<synchronous>, transform_indices = @transform_4, window_bounds = array<i64: 32, 32>}, {pipeline_mode = #tpu.pipeline_mode<synchronous>, transform_indices = @transform_5, window_bounds = array<i64: 1, 32>}, {transform_indices = @transform_6, window_bounds = array<i64: 64, 32>}]} {
    %c0 = arith.constant 0 : index
    %c0_0 = arith.constant 0 : index
    %0 = vector.load %arg2[%c0, %c0_0] : memref<64x32xf32, #tpu.memory_space<vmem>>, vector<64x32xf32>
    %1 = arith.truncf %0 : vector<64x32xf32> to vector<64x32xbf16>
    %c0_1 = arith.constant 0 : index
    %c0_2 = arith.constant 0 : index
    %2 = vector.load %arg3[%c0_1, %c0_2] : memref<32x32xbf16, #tpu.memory_space<vmem>>, vector<32x32xbf16>
    %cst = arith.constant dense<0.000000e+00> : vector<64x32xf32>
    %3 = tpu.matmul %1, %2, %cst {dimension_numbers = #tpu.dot_dimension_numbers<[1], [0], [0], [1], [0, 0, 1, 1], [], []>} : vector<64x32xbf16>, vector<32x32xbf16>, vector<64x32xf32> -> vector<64x32xf32>
    %c0_3 = arith.constant 0 : index
    %c0_4 = arith.constant 0 : index
    %4 = vector.load %arg4[%c0_3, %c0_4] : memref<1x32xf32, #tpu.memory_space<vmem>>, vector<1x32xf32>
    %5 = vector.broadcast %4 : vector<1x32xf32> to vector<64x32xf32>
    %6 = arith.addf %3, %5 : vector<64x32xf32>
    %cst_5 = arith.constant 0.000000e+00 : f32
    %7 = vector.broadcast %cst_5 : f32 to vector<64x32xf32>
    %8 = arith.maximumf %6, %7 : vector<64x32xf32>
    %9 = math.absf %6 : vector<64x32xf32>
    %cst_6 = arith.constant 0.000000e+00 : f32
    %10 = vector.broadcast %cst_6 : f32 to vector<64x32xf32>
    %11 = arith.subf %10, %9 : vector<64x32xf32>
    %12 = math.exp %11 : vector<64x32xf32>
    %13 = math.log1p %12 : vector<64x32xf32>
    %14 = arith.addf %8, %13 : vector<64x32xf32>
    %cst_7 = arith.constant 0.693147182 : f32
    %15 = vector.broadcast %cst_7 : f32 to vector<64x32xf32>
    %16 = arith.subf %14, %15 : vector<64x32xf32>
    %17 = arith.truncf %16 : vector<64x32xf32> to vector<64x32xbf16>
    %c0_8 = arith.constant 0 : index
    %c0_9 = arith.constant 0 : index
    %18 = vector.load %arg5[%c0_8, %c0_9] : memref<32x32xbf16, #tpu.memory_space<vmem>>, vector<32x32xbf16>
    %cst_10 = arith.constant dense<0.000000e+00> : vector<64x32xf32>
    %19 = tpu.matmul %17, %18, %cst_10 {dimension_numbers = #tpu.dot_dimension_numbers<[1], [0], [0], [1], [0, 0, 1, 1], [], []>} : vector<64x32xbf16>, vector<32x32xbf16>, vector<64x32xf32> -> vector<64x32xf32>
    %c0_11 = arith.constant 0 : index
    %c0_12 = arith.constant 0 : index
    %20 = vector.load %arg6[%c0_11, %c0_12] : memref<1x32xf32, #tpu.memory_space<vmem>>, vector<1x32xf32>
    %21 = vector.broadcast %20 : vector<1x32xf32> to vector<64x32xf32>
    %22 = arith.addf %19, %21 : vector<64x32xf32>
    %c0_13 = arith.constant 0 : index
    %c0_14 = arith.constant 0 : index
    %23 = vector.load %arg1[%c0_13, %c0_14] : memref<64x32xf32, #tpu.memory_space<vmem>>, vector<64x32xf32>
    %24 = arith.addf %23, %22 : vector<64x32xf32>
    %c0_15 = arith.constant 0 : index
    %c0_16 = arith.constant 0 : index
    %25 = vector.load %arg7[%c0_15, %c0_16] : memref<64x32xf32, #tpu.memory_space<vmem>>, vector<64x32xf32>
    tpu.vector_store %arg7[%c0_15, %c0_16], %24 {strides = array<i32>} : memref<64x32xf32, #tpu.memory_space<vmem>>, vector<64x32xf32>,
    return
  }
  func.func @transform_0(%arg0: i32) -> (i32, i32) {
    %c0_i32 = arith.constant 0 : i32
    %c0_i32_0 = arith.constant 0 : i32
    return %arg0, %c0_i32 : i32, i32
  }
  func.func @transform_1(%arg0: i32) -> (i32, i32) {
    %c0_i32 = arith.constant 0 : i32
    %c0_i32_0 = arith.constant 0 : i32
    return %arg0, %c0_i32 : i32, i32
  }
  func.func @transform_2(%arg0: i32) -> (i32, i32) {
    %c0_i32 = arith.constant 0 : i32
    %c0_i32_0 = arith.constant 0 : i32
    %c0_i32_1 = arith.constant 0 : i32
    return %c0_i32, %c0_i32_0 : i32, i32
  }
  func.func @transform_3(%arg0: i32) -> (i32, i32) {
    %c0_i32 = arith.constant 0 : i32
    %c0_i32_0 = arith.constant 0 : i32
    %c0_i32_1 = arith.constant 0 : i32
    return %c0_i32, %c0_i32_0 : i32, i32
  }
  func.func @transform_4(%arg0: i32) -> (i32, i32) {
    %c0_i32 = arith.constant 0 : i32
    %c0_i32_0 = arith.constant 0 : i32
    %c0_i32_1 = arith.constant 0 : i32
    return %c0_i32, %c0_i32_0 : i32, i32
  }
  func.func @transform_5(%arg0: i32) -> (i32, i32) {
    %c0_i32 = arith.constant 0 : i32
    %c0_i32_0 = arith.constant 0 : i32
    %c0_i32_1 = arith.constant 0 : i32
    return %c0_i32, %c0_i32_0 : i32, i32
  }
  func.func @transform_6(%arg0: i32) -> (i32, i32) {
    %c0_i32 = arith.constant 0 : i32
    %c0_i32_0 = arith.constant 0 : i32
    return %arg0, %c0_i32 : i32, i32
  }
}

</mosaic_0001>

<llo_original>
// kernel: interaction_forward.3
$region0: #{interaction_forward.3}
  #allocation0 [shape = 'u32[]', space=smem, size = 0x4, offset = 0x4, fixed_abs, tag = 'smem constant byte address 0x4 - core index']
  #allocation1 [shape = 'u32[144,128]{1,0:T(1,128)}', space=vmem, size = 0x12000, scoped, tag = 'internal scratch']
  %s0 = inlined_call_operand.vmem [shape: f32[64,32], index: 0, kind: input, shape index: {}]
  %s1 = inlined_call_operand.vmem [shape: f32[64,32], index: 1, kind: input, shape index: {}]
  %s2 = inlined_call_operand.vmem [shape: bf16[32,32], index: 2, kind: input, shape index: {}]
  %s3 = inlined_call_operand.vmem [shape: f32[1,32], index: 3, kind: input, shape index: {}]
  %s4 = inlined_call_operand.vmem [shape: bf16[32,32], index: 4, kind: input, shape index: {}]
  %s5 = inlined_call_operand.vmem [shape: f32[1,32], index: 5, kind: input, shape index: {}]
  %s6 = inlined_call_operand.vmem [shape: f32[64,32], index: 6, kind: output, shape index: {}]
  %s7 = sld [smem:[#allocation0]]
  $region34: #{interaction_forward.3} parent=0
    _
  %s9 = ssub.s32 1, %s7
  %s10 = scalar_select 0, %s9, %s7
  // Predicated region
  $region2: #{interaction_forward.3} parent=0 // pred_check
    _
  $region3: #{interaction_forward.3} parent=0 // pred_check_branch
    %12 = sbr.rel (0) target = $region5
  $region4: #{interaction_forward.3} parent=0 // pred_region
    _
  $region5: #{interaction_forward.3} parent=0 // pred_fallthru
    _
  // Predicated region
  $region6: #{interaction_forward.3} parent=0 // pred_check
    _
  $region7: #{interaction_forward.3} parent=0 // pred_check_branch
    %14 = sbr.rel (0) target = $region9
  $region8: #{interaction_forward.3} parent=0 // pred_region
    _
  $region9: #{interaction_forward.3} parent=0 // pred_fallthru
    _
  // Predicated region
  $region10: #{interaction_forward.3} parent=0 // pred_check
    _
  $region11: #{interaction_forward.3} parent=0 // pred_check_branch
    %16 = sbr.rel (0) target = $region13
  $region12: #{interaction_forward.3} parent=0 // pred_region
    _
  $region13: #{interaction_forward.3} parent=0 // pred_fallthru
    _
  // Predicated region
  $region14: #{interaction_forward.3} parent=0 // pred_check
    _
  $region15: #{interaction_forward.3} parent=0 // pred_check_branch
    %18 = sbr.rel (0) target = $region17
  $region16: #{interaction_forward.3} parent=0 // pred_region
    _
  $region17: #{interaction_forward.3} parent=0 // pred_fallthru
    _
  // Predicated region
  $region18: #{interaction_forward.3} parent=0 // pred_check
    _
  $region19: #{interaction_forward.3} parent=0 // pred_check_branch
    %20 = sbr.rel (0) target = $region21
  $region20: #{interaction_forward.3} parent=0 // pred_region
    _
  $region21: #{interaction_forward.3} parent=0 // pred_fallthru
    _
  // Predicated region
  $region22: #{interaction_forward.3} parent=0 // pred_check
    _
  $region23: #{interaction_forward.3} parent=0 // pred_check_branch
    %22 = sbr.rel (0) target = $region25
  $region24: #{interaction_forward.3} parent=0 // pred_region
    _
  $region25: #{interaction_forward.3} parent=0 // pred_fallthru
    _
  %v24 = vld [vmem:[%s1] sm:$0xff]
  %v25 = vld [vmem:[%s1 + $0x8] sm:$0xff]
  %v26 = vld [vmem:[%s1 + $0x10] sm:$0xff]
  %v27 = vld [vmem:[%s1 + $0x18] sm:$0xff]
  %v28 = vld [vmem:[%s1 + $0x20] sm:$0xff]
  %v29 = vld [vmem:[%s1 + $0x28] sm:$0xff]
  %v30 = vld [vmem:[%s1 + $0x30] sm:$0xff]
  %v31 = vld [vmem:[%s1 + $0x38] sm:$0xff]
  %v32 = vpack.c.bf16 %v25, %v24
  %v33 = vpack.c.bf16 %v27, %v26
  %v34 = vpack.c.bf16 %v29, %v28
  %v35 = vpack.c.bf16 %v31, %v30
  %v36 = vld [vmem:[%s2] sm:$0xf]
  %v37 = vld [vmem:[%s2 + $0x4] sm:$0xf]
  %v38 = vld [vmem:[%s2 + $0x8] sm:$0xf]
  %v39 = vld [vmem:[%s2 + $0xc] sm:$0xf]
  %v40 = vld [vmem:[%s3] sm:$0x1]
  %v42 = vlaneseq
  %v43 = vshrl.u32 %v42, 7
  %v44 = vsub.s32 0, %v43
  %v45 = vrot.slane %v40, %v44
  %v51 = vunpack.c.l.b16 %v36
  %v52 = vunpack.c.l.b16 %v37
  %v53 = vunpack.c.l.b16 %v38
  %v54 = vunpack.c.l.b16 %v39
  %v55 = vpack.c.b16 %v52, %v51
  %v56 = vpack.c.b16 %v54, %v53
  %vm59 = vcmask 261120
  %v61 = vsel %vm59, %v32, 0
  %v64 = vsel %vm59, %v33, 0
  %v67 = vsel %vm59, %v34, 0
  %v70 = vsel %vm59, %v35, 0
  %72 = vmatprep.subr.bf16.mxu0 0
  %73 = vmatpush1.bf16.msra.mxu0 %v55
  %74 = vmatprep.subr.bf16.mxu0 0
  %75 = vmatpush1.bf16.msra.mxu0 %v56
  %76 = vmatprep.subr.bf16.mxu0 0
  %77 = vmatpush1.bf16.msra.mxu0 0
  %78 = vmatprep.subr.bf16.mxu0 0
  %79 = vmatpush1.bf16.msra.mxu0 0
  %80 = vmatprep.subr.bf16.mxu0 0
  %81 = vmatpush1.bf16.msra.mxu0 0
  %82 = vmatprep.subr.bf16.mxu0 0
  %83 = vmatpush1.bf16.msra.mxu0 0
  %84 = vmatprep.subr.bf16.mxu0 0
  %85 = vmatpush1.bf16.msra.mxu0 0
  %86 = vmatprep.subr.bf16.mxu0 0
  %87 = vmatpush1.bf16.msra.mxu0 0
  %88 = vmatprep.subr.bf16.mxu0 0
  %89 = vmatpush1.bf16.msra.mxu0 0
  %90 = vmatprep.subr.bf16.mxu0 0
  %91 = vmatpush1.bf16.msra.mxu0 0
  %92 = vmatprep.subr.bf16.mxu0 0
  %93 = vmatpush1.bf16.msra.mxu0 0
  %94 = vmatprep.subr.bf16.mxu0 0
  %95 = vmatpush1.bf16.msra.mxu0 0
  %96 = vmatprep.subr.bf16.mxu0 0
  %97 = vmatpush1.bf16.msra.mxu0 0
  %98 = vmatprep.subr.bf16.mxu0 0
  %99 = vmatpush1.bf16.msra.mxu0 0
  %100 = vmatprep.subr.bf16.mxu0 0
  %101 = vmatpush1.bf16.msra.mxu0 0
  %102 = vmatprep.subr.bf16.mxu0 0
  %103 = vmatpush1.bf16.msra.mxu0 0
  %104 = vmatprep.mubr.bf16.mxu0 0
  %105 = vmatmul.mubr.bf16.gmra.mrb[0].mxu0 %v61
  %v106 = vpop.f32.mrb[0].mxu0
  %v107 = vadd.f32 %v45, %v106
  %v108 = vpop.f32.mrb[0].mxu0
  %v109 = vpop.f32.mrb[0].mxu0
  %v110 = vadd.f32 %v45, %v109
  %v111 = vpop.f32.mrb[0].mxu0
  %112 = vmatprep.mubr.bf16.mxu0 0
  %113 = vmatmul.mubr.bf16.gmra.mrb[0].mxu0 %v64
  %v114 = vpop.f32.mrb[0].mxu0
  %v115 = vadd.f32 %v45, %v114
  %v116 = vpop.f32.mrb[0].mxu0
  %v117 = vpop.f32.mrb[0].mxu0
  %v118 = vadd.f32 %v45, %v117
  %v119 = vpop.f32.mrb[0].mxu0
  %120 = vmatprep.mubr.bf16.mxu0 0
  %121 = vmatmul.mubr.bf16.gmra.mrb[0].mxu0 %v67
  %v122 = vpop.f32.mrb[0].mxu0
  %v123 = vadd.f32 %v45, %v122
  %v124 = vpop.f32.mrb[0].mxu0
  %v125 = vpop.f32.mrb[0].mxu0
  %v126 = vadd.f32 %v45, %v125
  %v127 = vpop.f32.mrb[0].mxu0
  %128 = vmatprep.mubr.bf16.mxu0 0
  %129 = vmatmul.mubr.bf16.gmra.mrb[0].mxu0 %v70
  %v130 = vpop.f32.mrb[0].mxu0
  %v131 = vadd.f32 %v45, %v130
  %v132 = vpop.f32.mrb[0].mxu0
  %v133 = vpop.f32.mrb[0].mxu0
  %v134 = vadd.f32 %v45, %v133
  %v135 = vpop.f32.mrb[0].mxu0
  %136 = vdwg.mxu0
  %v137 = vmax.f32 %v107, 0.0
  %v138 = vmax.f32 %v110, 0.0
  %v139 = vmax.f32 %v115, 0.0
  %v140 = vmax.f32 %v118, 0.0
  %v141 = vmax.f32 %v123, 0.0
  %v142 = vmax.f32 %v126, 0.0
  %v143 = vmax.f32 %v131, 0.0
  %v144 = vmax.f32 %v134, 0.0
  %v145 = vand.u32 2147483647, %v107
  %v146 = vand.u32 2147483647, %v110
  %v147 = vand.u32 2147483647, %v115
  %v148 = vand.u32 2147483647, %v118
  %v149 = vand.u32 2147483647, %v123
  %v150 = vand.u32 2147483647, %v126
  %v151 = vand.u32 2147483647, %v131
  %v152 = vand.u32 2147483647, %v134
  %v153 = vsub.f32 0.0, %v145
  %v154 = vsub.f32 0.0, %v146
  %v155 = vsub.f32 0.0, %v147
  %v156 = vsub.f32 0.0, %v148
  %v157 = vsub.f32 0.0, %v149
  %v158 = vsub.f32 0.0, %v150
  %v159 = vsub.f32 0.0, %v151
  %v160 = vsub.f32 0.0, %v152
  %v161 = vmul.f32 %v153, 1.442695
  %v162 = vpow.pop %v161
  %v163 = vmul.f32 %v154, 1.442695
  %v164 = vpow.pop %v163
  %v165 = vmul.f32 %v155, 1.442695
  %v166 = vpow.pop %v165
  %v167 = vmul.f32 %v156, 1.442695
  %v168 = vpow.pop %v167
  %v169 = vmul.f32 %v157, 1.442695
  %v170 = vpow.pop %v169
  %v171 = vmul.f32 %v158, 1.442695
  %v172 = vpow.pop %v171
  %v173 = vmul.f32 %v159, 1.442695
  %v174 = vpow.pop %v173
  %v175 = vmul.f32 %v160, 1.442695
  %v176 = vpow.pop %v175
  %v177 = vadd.f32 %v162, 1.0
  %v178 = vlog2.pop %v177
  %v179 = vmul.f32 %v178, 0.6931472
  %v180 = vmul.f32 -0.5, %v162
  %v181 = vadd.f32 %v180, 1.0
  %v182 = vmul.f32 %v181, %v162
  %v183 = vand.u32 2147483647, %v162
  %vm184 = vcmp.lt.f32.partialorder %v183, 0.0004427343
  %v185 = vsel %vm184, %v182, %v179
  %v186 = vadd.f32 %v164, 1.0
  %v187 = vlog2.pop %v186
  %v188 = vmul.f32 %v187, 0.6931472
  %v189 = vmul.f32 -0.5, %v164
  %v190 = vadd.f32 %v189, 1.0
  %v191 = vmul.f32 %v190, %v164
  %v192 = vand.u32 2147483647, %v164
  %vm193 = vcmp.lt.f32.partialorder %v192, 0.0004427343
  %v194 = vsel %vm193, %v191, %v188
  %v195 = vadd.f32 %v166, 1.0
  %v196 = vlog2.pop %v195
  %v197 = vmul.f32 %v196, 0.6931472
  %v198 = vmul.f32 -0.5, %v166
  %v199 = vadd.f32 %v198, 1.0
  %v200 = vmul.f32 %v199, %v166
  %v201 = vand.u32 2147483647, %v166
  %vm202 = vcmp.lt.f32.partialorder %v201, 0.0004427343
  %v203 = vsel %vm202, %v200, %v197
  %v204 = vadd.f32 %v168, 1.0
  %v205 = vlog2.pop %v204
  %v206 = vmul.f32 %v205, 0.6931472
  %v207 = vmul.f32 -0.5, %v168
  %v208 = vadd.f32 %v207, 1.0
  %v209 = vmul.f32 %v208, %v168
  %v210 = vand.u32 2147483647, %v168
  %vm211 = vcmp.lt.f32.partialorder %v210, 0.0004427343
  %v212 = vsel %vm211, %v209, %v206
  %v213 = vadd.f32 %v170, 1.0
  %v214 = vlog2.pop %v213
  %v215 = vmul.f32 %v214, 0.6931472
  %v216 = vmul.f32 -0.5, %v170
  %v217 = vadd.f32 %v216, 1.0
  %v218 = vmul.f32 %v217, %v170
  %v219 = vand.u32 2147483647, %v170
  %vm220 = vcmp.lt.f32.partialorder %v219, 0.0004427343
  %v221 = vsel %vm220, %v218, %v215
  %v222 = vadd.f32 %v172, 1.0
  %v223 = vlog2.pop %v222
  %v224 = vmul.f32 %v223, 0.6931472
  %v225 = vmul.f32 -0.5, %v172
  %v226 = vadd.f32 %v225, 1.0
  %v227 = vmul.f32 %v226, %v172
  %v228 = vand.u32 2147483647, %v172
  %vm229 = vcmp.lt.f32.partialorder %v228, 0.0004427343
  %v230 = vsel %vm229, %v227, %v224
  %v231 = vadd.f32 %v174, 1.0
  %v232 = vlog2.pop %v231
  %v233 = vmul.f32 %v232, 0.6931472
  %v234 = vmul.f32 -0.5, %v174
  %v235 = vadd.f32 %v234, 1.0
  %v236 = vmul.f32 %v235, %v174
  %v237 = vand.u32 2147483647, %v174
  %vm238 = vcmp.lt.f32.partialorder %v237, 0.0004427343
  %v239 = vsel %vm238, %v236, %v233
  %v240 = vadd.f32 %v176, 1.0
  %v241 = vlog2.pop %v240
  %v242 = vmul.f32 %v241, 0.6931472
  %v243 = vmul.f32 -0.5, %v176
  %v244 = vadd.f32 %v243, 1.0
  %v245 = vmul.f32 %v244, %v176
  %v246 = vand.u32 2147483647, %v176
  %vm247 = vcmp.lt.f32.partialorder %v246, 0.0004427343
  %v248 = vsel %vm247, %v245, %v242
  %v249 = vadd.f32 %v137, %v185
  %v250 = vadd.f32 %v138, %v194
  %v251 = vadd.f32 %v139, %v203
  %v252 = vadd.f32 %v140, %v212
  %v253 = vadd.f32 %v141, %v221
  %v254 = vadd.f32 %v142, %v230
  %v255 = vadd.f32 %v143, %v239
  %v256 = vadd.f32 %v144, %v248
  %v257 = vsub.f32 %v249, 0.6931472
  %v258 = vsub.f32 %v250, 0.6931472
  %v259 = vsub.f32 %v251, 0.6931472
  %v260 = vsub.f32 %v252, 0.6931472
  %v261 = vsub.f32 %v253, 0.6931472
  %v262 = vsub.f32 %v254, 0.6931472
  %v263 = vsub.f32 %v255, 0.6931472
  %v264 = vsub.f32 %v256, 0.6931472
  %v265 = vpack.c.bf16 %v258, %v257
  %v266 = vpack.c.bf16 %v260, %v259
  %v267 = vpack.c.bf16 %v262, %v261
  %v268 = vpack.c.bf16 %v264, %v263
  %v269 = vld [vmem:[%s4] sm:$0xf]
  %v270 = vld [vmem:[%s4 + $0x4] sm:$0xf]
  %v271 = vld [vmem:[%s4 + $0x8] sm:$0xf]
  %v272 = vld [vmem:[%s4 + $0xc] sm:$0xf]
  %v273 = vld [vmem:[%s5] sm:$0x1]
  %v275 = vlaneseq
  %v276 = vshrl.u32 %v275, 7
  %v277 = vsub.s32 0, %v276
  %v278 = vrot.slane %v273, %v277
  %v284 = vunpack.c.l.b16 %v269
  %v285 = vunpack.c.l.b16 %v270
  %v286 = vunpack.c.l.b16 %v271
  %v287 = vunpack.c.l.b16 %v272
  %v288 = vpack.c.b16 %v285, %v284
  %v289 = vpack.c.b16 %v287, %v286
  %v293 = vsel %vm59, %v265, 0
  %v296 = vsel %vm59, %v266, 0
  %v299 = vsel %vm59, %v267, 0
  %v302 = vsel %vm59, %v268, 0
  %304 = vmatprep.subr.bf16.mxu0 0
  %305 = vmatpush1.bf16.msra.mxu0 %v288
  %306 = vmatprep.subr.bf16.mxu0 0
  %307 = vmatpush1.bf16.msra.mxu0 %v289
  %308 = vmatprep.subr.bf16.mxu0 0
  %309 = vmatpush1.bf16.msra.mxu0 0
  %310 = vmatprep.subr.bf16.mxu0 0
  %311 = vmatpush1.bf16.msra.mxu0 0
  %312 = vmatprep.subr.bf16.mxu0 0
  %313 = vmatpush1.bf16.msra.mxu0 0
  %314 = vmatprep.subr.bf16.mxu0 0
  %315 = vmatpush1.bf16.msra.mxu0 0
  %316 = vmatprep.subr.bf16.mxu0 0
  %317 = vmatpush1.bf16.msra.mxu0 0
  %318 = vmatprep.subr.bf16.mxu0 0
  %319 = vmatpush1.bf16.msra.mxu0 0
  %320 = vmatprep.subr.bf16.mxu0 0
  %321 = vmatpush1.bf16.msra.mxu0 0
  %322 = vmatprep.subr.bf16.mxu0 0
  %323 = vmatpush1.bf16.msra.mxu0 0
  %324 = vmatprep.subr.bf16.mxu0 0
  %325 = vmatpush1.bf16.msra.mxu0 0
  %326 = vmatprep.subr.bf16.mxu0 0
  %327 = vmatpush1.bf16.msra.mxu0 0
  %328 = vmatprep.subr.bf16.mxu0 0
  %329 = vmatpush1.bf16.msra.mxu0 0
  %330 = vmatprep.subr.bf16.mxu0 0
  %331 = vmatpush1.bf16.msra.mxu0 0
  %332 = vmatprep.subr.bf16.mxu0 0
  %333 = vmatpush1.bf16.msra.mxu0 0
  %334 = vmatprep.subr.bf16.mxu0 0
  %335 = vmatpush1.bf16.msra.mxu0 0
  %336 = vmatprep.mubr.bf16.mxu0 0
  %337 = vmatmul.mubr.bf16.gmra.mrb[0].mxu0 %v293
  %v338 = vpop.f32.mrb[0].mxu0
  %v339 = vadd.f32 %v278, %v338
  %v340 = vpop.f32.mrb[0].mxu0
  %v341 = vpop.f32.mrb[0].mxu0
  %v342 = vadd.f32 %v278, %v341
  %v343 = vpop.f32.mrb[0].mxu0
  %344 = vmatprep.mubr.bf16.mxu0 0
  %345 = vmatmul.mubr.bf16.gmra.mrb[0].mxu0 %v296
  %v346 = vpop.f32.mrb[0].mxu0
  %v347 = vadd.f32 %v278, %v346
  %v348 = vpop.f32.mrb[0].mxu0
  %v349 = vpop.f32.mrb[0].mxu0
  %v350 = vadd.f32 %v278, %v349
  %v351 = vpop.f32.mrb[0].mxu0
  %352 = vmatprep.mubr.bf16.mxu0 0
  %353 = vmatmul.mubr.bf16.gmra.mrb[0].mxu0 %v299
  %v354 = vpop.f32.mrb[0].mxu0
  %v355 = vadd.f32 %v278, %v354
  %v356 = vpop.f32.mrb[0].mxu0
  %v357 = vpop.f32.mrb[0].mxu0
  %v358 = vadd.f32 %v278, %v357
  %v359 = vpop.f32.mrb[0].mxu0
  %360 = vmatprep.mubr.bf16.mxu0 0
  %361 = vmatmul.mubr.bf16.gmra.mrb[0].mxu0 %v302
  %v362 = vpop.f32.mrb[0].mxu0
  %v363 = vadd.f32 %v278, %v362
  %v364 = vpop.f32.mrb[0].mxu0
  %v365 = vpop.f32.mrb[0].mxu0
  %v366 = vadd.f32 %v278, %v365
  %v367 = vpop.f32.mrb[0].mxu0
  %368 = vdwg.mxu0
  %v369 = vld [vmem:[%s0] sm:$0xff]
  %v370 = vld [vmem:[%s0 + $0x8] sm:$0xff]
  %v371 = vld [vmem:[%s0 + $0x10] sm:$0xff]
  %v372 = vld [vmem:[%s0 + $0x18] sm:$0xff]
  %v373 = vld [vmem:[%s0 + $0x20] sm:$0xff]
  %v374 = vld [vmem:[%s0 + $0x28] sm:$0xff]
  %v375 = vld [vmem:[%s0 + $0x30] sm:$0xff]
  %v376 = vld [vmem:[%s0 + $0x38] sm:$0xff]
  %v377 = vadd.f32 %v369, %v339
  %v378 = vadd.f32 %v370, %v342
  %v379 = vadd.f32 %v371, %v347
  %v380 = vadd.f32 %v372, %v350
  %v381 = vadd.f32 %v373, %v355
  %v382 = vadd.f32 %v374, %v358
  %v383 = vadd.f32 %v375, %v363
  %v384 = vadd.f32 %v376, %v366
  %385 = vst.msk [vmem:[%s6] sm:$0xff] %vm59, %v377
  %386 = vst.msk [vmem:[%s6 + $0x8] sm:$0xff] %vm59, %v378
  %387 = vst.msk [vmem:[%s6 + $0x10] sm:$0xff] %vm59, %v379
  %388 = vst.msk [vmem:[%s6 + $0x18] sm:$0xff] %vm59, %v380
  %389 = vst.msk [vmem:[%s6 + $0x20] sm:$0xff] %vm59, %v381
  %390 = vst.msk [vmem:[%s6 + $0x28] sm:$0xff] %vm59, %v382
  %391 = vst.msk [vmem:[%s6 + $0x30] sm:$0xff] %vm59, %v383
  %392 = vst.msk [vmem:[%s6 + $0x38] sm:$0xff] %vm59, %v384
  // Predicated region
  $region26: #{interaction_forward.3} parent=0 // pred_check
    _
  $region27: #{interaction_forward.3} parent=0 // pred_check_branch
    %394 = sbr.rel (0) target = $region29
  $region28: #{interaction_forward.3} parent=0 // pred_region
    _
  $region29: #{interaction_forward.3} parent=0 // pred_fallthru
    _
  // Predicated region
  $region30: #{interaction_forward.3} parent=0 // pred_check
    _
  $region31: #{interaction_forward.3} parent=0 // pred_check_branch
    %396 = sbr.rel (0) target = $region33
  $region32: #{interaction_forward.3} parent=0 // pred_region
    _
  $region33: #{interaction_forward.3} parent=0 // pred_fallthru
    _

// kernel: interaction_forward.2
$region0: #{interaction_forward.2}
  #allocation0 [shape = 'u32[]', space=smem, size = 0x4, offset = 0x4, fixed_abs, tag = 'smem constant byte address 0x4 - core index']
  #allocation1 [shape = 'u32[144,128]{1,0:T(1,128)}', space=vmem, size = 0x12000, scoped, tag = 'internal scratch']
  %s0 = inlined_call_operand.vmem [shape: bf16[512,32], index: 0, kind: input, shape index: {}]
  %s1 = inlined_call_operand.vmem [shape: f32[512,16], index: 1, kind: input, shape index: {}]
  %s2 = inlined_call_operand.vmem [shape: f32[512,1], index: 2, kind: input, shape index: {}]
  %s3 = inlined_call_operand.vmem [shape: bf16[32,64], index: 3, kind: input, shape index: {}]
  %s4 = inlined_call_operand.vmem [shape: bf16[16,64], index: 4, kind: input, shape index: {}]
  %s5 = inlined_call_operand.vmem [shape: f32[1,64], index: 5, kind: input, shape index: {}]
  %s6 = inlined_call_operand.vmem [shape: bf16[64,64], index: 6, kind: input, shape index: {}]
  %s7 = inlined_call_operand.vmem [shape: f32[1,64], index: 7, kind: input, shape index: {}]
  %s8 = inlined_call_operand.vmem [shape: f32[512,32], index: 8, kind: output, shape index: {}]
  %s9 = sld [smem:[#allocation0]]
  $region65: #{interaction_forward.2} parent=0
    _
  %s11 = ssub.s32 1, %s9
  %s12 = scalar_select 0, %s11, %s9
  loop: start=0, step=1, limit=4
  $region2: #{interaction_forward.2} parent=0 // loop_pre_header
    _
  $region3: #{interaction_forward.2} parent=0 // loop_header
    %s14 = sphi 0, %s18
    %p15 = scmp.ge.s32.totalorder %s14, 4
    %s24 = sphi 0, %s26
    %s27 = sphi 0, %s24
    %s28 = sphi 0, %s27
    %s44 = sphi 0, %s28
    %s50 = sphi 0, %s52
    %s53 = sphi 0, %s50
    %s54 = sphi 0, %s53
    %s70 = sphi 0, %s54
    %s76 = sphi 0, %s78
    %s79 = sphi 0, %s76
    %s80 = sphi 0, %s79
    %s96 = sphi 0, %s80
    %s100 = sphi 0, %s100
    %s102 = sphi 0, %s100
    %s103 = sphi 0, %s102
    %s117 = sphi 0, %s103
    %s121 = sphi 0, %s121
    %s123 = sphi 0, %s121
    %s124 = sphi 0, %s123
    %s138 = sphi 0, %s124
    %s142 = sphi 0, %s142
    %s144 = sphi 0, %s142
    %s145 = sphi 0, %s144
    %s159 = sphi 0, %s145
    %s163 = sphi 0, %s163
    %s165 = sphi 0, %s163
    %s166 = sphi 0, %s165
    %s180 = sphi 0, %s166
    %s184 = sphi 0, %s184
    %s186 = sphi 0, %s184
    %s187 = sphi 0, %s186
    %s201 = sphi 0, %s187
    %s207 = sphi 0, %s209
    %s210 = sphi 0, %s207
    %s211 = sphi 0, %s210
    %s227 = sphi 0, %s211
  $region4: #{interaction_forward.2} parent=0 // loop_header_branch
    %17 = sbr.rel (%p15) target = $region8
  $region5: #{interaction_forward.2} parent=0 // loop_body
    %s19 = ssub.s32 %s14, 1
    %s20 = ssub.s32 %s14, 2
    %s21 = sadd.s32 %s14, 1
    %s22 = ssub.s32 %s14, %s21
    %p23 = scmp.eq.s32.totalorder %s22, 0
    %s25 = sadd.s32 %s24, 1
    %s26 = scalar_select %p23, %s24, %s25
    %p29 = pneg %p23
    %p30 = scmp.eq.s32.totalorder %s14, 1
    %p31 = por %p29, %p30
    %p32 = scmp.ne.s32.totalorder %s24, %s27
    %p33 = scmp.eq.s32.totalorder %s14, 0
    %p34 = por %p32, %p33
    %p35 = scmp.ne.s32.totalorder %s24, %s27
    %p36 = scmp.eq.s32.totalorder %s19, 1
    %p37 = por %p35, %p36
    %p38 = scmp.ne.s32.totalorder %s27, %s28
    %p39 = scmp.eq.s32.totalorder %s19, 0
    %p40 = por %p38, %p39
    %p41 = scmp.ne.s32.totalorder %s27, %s28
    %p42 = scmp.eq.s32.totalorder %s20, 1
    %p43 = por %p41, %p42
    %p45 = scmp.ne.s32.totalorder %s28, %s44
    %p46 = scmp.eq.s32.totalorder %s20, 0
    %p47 = por %p45, %p46
    %s48 = ssub.s32 %s14, %s21
    %p49 = scmp.eq.s32.totalorder %s48, 0
    %s51 = sadd.s32 %s50, 1
    %s52 = scalar_select %p49, %s50, %s51
    %p55 = pneg %p49
    %p56 = scmp.eq.s32.totalorder %s14, 1
    %p57 = por %p55, %p56
    %p58 = scmp.ne.s32.totalorder %s50, %s53
    %p59 = scmp.eq.s32.totalorder %s14, 0
    %p60 = por %p58, %p59
    %p61 = scmp.ne.s32.totalorder %s50, %s53
    %p62 = scmp.eq.s32.totalorder %s19, 1
    %p63 = por %p61, %p62
    %p64 = scmp.ne.s32.totalorder %s53, %s54
    %p65 = scmp.eq.s32.totalorder %s19, 0
    %p66 = por %p64, %p65
    %p67 = scmp.ne.s32.totalorder %s53, %s54
    %p68 = scmp.eq.s32.totalorder %s20, 1
    %p69 = por %p67, %p68
    %p71 = scmp.ne.s32.totalorder %s54, %s70
    %p72 = scmp.eq.s32.totalorder %s20, 0
    %p73 = por %p71, %p72
    %s74 = ssub.s32 %s14, %s21
    %p75 = scmp.eq.s32.totalorder %s74, 0
    %s77 = sadd.s32 %s76, 1
    %s78 = scalar_select %p75, %s76, %s77
    %p81 = pneg %p75
    %p82 = scmp.eq.s32.totalorder %s14, 1
    %p83 = por %p81, %p82
    %p84 = scmp.ne.s32.totalorder %s76, %s79
    %p85 = scmp.eq.s32.totalorder %s14, 0
    %p86 = por %p84, %p85
    %p87 = scmp.ne.s32.totalorder %s76, %s79
    %p88 = scmp.eq.s32.totalorder %s19, 1
    %p89 = por %p87, %p88
    %p90 = scmp.ne.s32.totalorder %s79, %s80
    %p91 = scmp.eq.s32.totalorder %s19, 0
    %p92 = por %p90, %p91
    %p93 = scmp.ne.s32.totalorder %s79, %s80
    %p94 = scmp.eq.s32.totalorder %s20, 1
    %p95 = por %p93, %p94
    %p97 = scmp.ne.s32.totalorder %s80, %s96
    %p98 = scmp.eq.s32.totalorder %s20, 0
    %p99 = por %p97, %p98
    %s101 = sadd.s32 %s100, 1
    %p104 = scmp.eq.s32.totalorder %s14, 1
    %p105 = scmp.ne.s32.totalorder %s100, %s102
    %p106 = scmp.eq.s32.totalorder %s14, 0
    %p107 = por %p105, %p106
    %p108 = scmp.ne.s32.totalorder %s100, %s102
    %p109 = scmp.eq.s32.totalorder %s19, 1
    %p110 = por %p108, %p109
    %p111 = scmp.ne.s32.totalorder %s102, %s103
    %p112 = scmp.eq.s32.totalorder %s19, 0
    %p113 = por %p111, %p112
    %p114 = scmp.ne.s32.totalorder %s102, %s103
    %p115 = scmp.eq.s32.totalorder %s20, 1
    %p116 = por %p114, %p115
    %p118 = scmp.ne.s32.totalorder %s103, %s117
    %p119 = scmp.eq.s32.totalorder %s20, 0
    %p120 = por %p118, %p119
    %s122 = sadd.s32 %s121, 1
    %p125 = scmp.eq.s32.totalorder %s14, 1
    %p126 = scmp.ne.s32.totalorder %s121, %s123
    %p127 = scmp.eq.s32.totalorder %s14, 0
    %p128 = por %p126, %p127
    %p129 = scmp.ne.s32.totalorder %s121, %s123
    %p130 = scmp.eq.s32.totalorder %s19, 1
    %p131 = por %p129, %p130
    %p132 = scmp.ne.s32.totalorder %s123, %s124
    %p133 = scmp.eq.s32.totalorder %s19, 0
    %p134 = por %p132, %p133
    %p135 = scmp.ne.s32.totalorder %s123, %s124
    %p136 = scmp.eq.s32.totalorder %s20, 1
    %p137 = por %p135, %p136
    %p139 = scmp.ne.s32.totalorder %s124, %s138
    %p140 = scmp.eq.s32.totalorder %s20, 0
    %p141 = por %p139, %p140
    %s143 = sadd.s32 %s142, 1
    %p146 = scmp.eq.s32.totalorder %s14, 1
    %p147 = scmp.ne.s32.totalorder %s142, %s144
    %p148 = scmp.eq.s32.totalorder %s14, 0
    %p149 = por %p147, %p148
    %p150 = scmp.ne.s32.totalorder %s142, %s144
    %p151 = scmp.eq.s32.totalorder %s19, 1
    %p152 = por %p150, %p151
    %p153 = scmp.ne.s32.totalorder %s144, %s145
    %p154 = scmp.eq.s32.totalorder %s19, 0
    %p155 = por %p153, %p154
    %p156 = scmp.ne.s32.totalorder %s144, %s145
    %p157 = scmp.eq.s32.totalorder %s20, 1
    %p158 = por %p156, %p157
    %p160 = scmp.ne.s32.totalorder %s145, %s159
    %p161 = scmp.eq.s32.totalorder %s20, 0
    %p162 = por %p160, %p161
    %s164 = sadd.s32 %s163, 1
    %p167 = scmp.eq.s32.totalorder %s14, 1
    %p168 = scmp.ne.s32.totalorder %s163, %s165
    %p169 = scmp.eq.s32.totalorder %s14, 0
    %p170 = por %p168, %p169
    %p171 = scmp.ne.s32.totalorder %s163, %s165
    %p172 = scmp.eq.s32.totalorder %s19, 1
    %p173 = por %p171, %p172
    %p174 = scmp.ne.s32.totalorder %s165, %s166
    %p175 = scmp.eq.s32.totalorder %s19, 0
    %p176 = por %p174, %p175
    %p177 = scmp.ne.s32.totalorder %s165, %s166
    %p178 = scmp.eq.s32.totalorder %s20, 1
    %p179 = por %p177, %p178
    %p181 = scmp.ne.s32.totalorder %s166, %s180
    %p182 = scmp.eq.s32.totalorder %s20, 0
    %p183 = por %p181, %p182
    %s185 = sadd.s32 %s184, 1
    %p188 = scmp.eq.s32.totalorder %s14, 1
    %p189 = scmp.ne.s32.totalorder %s184, %s186
    %p190 = scmp.eq.s32.totalorder %s14, 0
    %p191 = por %p189, %p190
    %p192 = scmp.ne.s32.totalorder %s184, %s186
    %p193 = scmp.eq.s32.totalorder %s19, 1
    %p194 = por %p192, %p193
    %p195 = scmp.ne.s32.totalorder %s186, %s187
    %p196 = scmp.eq.s32.totalorder %s19, 0
    %p197 = por %p195, %p196
    %p198 = scmp.ne.s32.totalorder %s186, %s187
    %p199 = scmp.eq.s32.totalorder %s20, 1
    %p200 = por %p198, %p199
    %p202 = scmp.ne.s32.totalorder %s187, %s201
    %p203 = scmp.eq.s32.totalorder %s20, 0
    %p204 = por %p202, %p203
    %s205 = ssub.s32 %s14, %s21
    %p206 = scmp.eq.s32.totalorder %s205, 0
    %s208 = sadd.s32 %s207, 1
    %s209 = scalar_select %p206, %s207, %s208
    %p212 = pneg %p206
    %p213 = scmp.eq.s32.totalorder %s14, 1
    %p214 = por %p212, %p213
    %p215 = scmp.ne.s32.totalorder %s207, %s210
    %p216 = scmp.eq.s32.totalorder %s14, 0
    %p217 = por %p215, %p216
    %p218 = scmp.ne.s32.totalorder %s207, %s210
    %p219 = scmp.eq.s32.totalorder %s19, 1
    %p220 = por %p218, %p219
    %p221 = scmp.ne.s32.totalorder %s210, %s211
    %p222 = scmp.eq.s32.totalorder %s19, 0
    %p223 = por %p221, %p222
    %p224 = scmp.ne.s32.totalorder %s210, %s211
    %p225 = scmp.eq.s32.totalorder %s20, 1
    %p226 = por %p224, %p225
    %p228 = scmp.ne.s32.totalorder %s211, %s227
    %p229 = scmp.eq.s32.totalorder %s20, 0
    %p230 = por %p228, %p229
    %p231 = scmp.le.s32.totalorder 1, %s14
    %p232 = scmp.lt.s32.totalorder %s14, 3
    %p233 = pnand %p231, %p232
    %p234 = pneg %p233
    // Predicated region
    $region9: #{interaction_forward.2} parent=5 // pred_check
      _
    $region10: #{interaction_forward.2} parent=5 // pred_check_branch
      %236 = sbr.rel (%p233) target = $region12
    $region11: #{interaction_forward.2} parent=5 // pred_region
      %s237 = ssub.s32 %s14, 1
      // Predicated region
      $region13: #{interaction_forward.2} parent=11 // pred_check
        %p238 = pneg %p113
      $region14: #{interaction_forward.2} parent=11 // pred_check_branch
        %240 = sbr.rel (%p238) target = $region16
      $region15: #{interaction_forward.2} parent=11 // pred_region
        _
      $region16: #{interaction_forward.2} parent=11 // pred_fallthru
        _
      // Predicated region
      $region17: #{interaction_forward.2} parent=11 // pred_check
        %p241 = pneg %p134
      $region18: #{interaction_forward.2} parent=11 // pred_check_branch
        %243 = sbr.rel (%p241) target = $region20
      $region19: #{interaction_forward.2} parent=11 // pred_region
        _
      $region20: #{interaction_forward.2} parent=11 // pred_fallthru
        _
      // Predicated region
      $region21: #{interaction_forward.2} parent=11 // pred_check
        %p244 = pneg %p155
      $region22: #{interaction_forward.2} parent=11 // pred_check_branch
        %246 = sbr.rel (%p244) target = $region24
      $region23: #{interaction_forward.2} parent=11 // pred_region
        _
      $region24: #{interaction_forward.2} parent=11 // pred_fallthru
        _
      // Predicated region
      $region25: #{interaction_forward.2} parent=11 // pred_check
        %p247 = pneg %p176
      $region26: #{interaction_forward.2} parent=11 // pred_check_branch
        %249 = sbr.rel (%p247) target = $region28
      $region27: #{interaction_forward.2} parent=11 // pred_region
        _
      $region28: #{interaction_forward.2} parent=11 // pred_fallthru
        _
      // Predicated region
      $region29: #{interaction_forward.2} parent=11 // pred_check
        %p250 = pneg %p197
      $region30: #{interaction_forward.2} parent=11 // pred_check_branch
        %252 = sbr.rel (%p250) target = $region32
      $region31: #{interaction_forward.2} parent=11 // pred_region
        _
      $region32: #{interaction_forward.2} parent=11 // pred_fallthru
        _
    $region12: #{interaction_forward.2} parent=5 // pred_fallthru
      _
    %p253 = scmp.lt.s32.totalorder %s14, 2
    // Predicated region
    $region33: #{interaction_forward.2} parent=5 // pred_check
      %p254 = pneg %p253
    $region34: #{interaction_forward.2} parent=5 // pred_check_branch
      %256 = sbr.rel (%p254) target = $region36
    $region35: #{interaction_forward.2} parent=5 // pred_region
      // Predicated region
      $region37: #{interaction_forward.2} parent=35 // pred_check
        %p257 = pneg %p34
      $region38: #{interaction_forward.2} parent=35 // pred_check_branch
        %259 = sbr.rel (%p257) target = $region40
      $region39: #{interaction_forward.2} parent=35 // pred_region
        %s260 = smul.u32 32, %s14
        %p261 = scmp.lt.s32.totalorder %s260, 63
        %s262 = scalar_select %p261, %s260, 63
        %s263 = smul.addr %s262, 4
        %s264 = scalar_lea.vmem %s0, %s263
        %s265 = smul.u32 32, %s14
      $region40: #{interaction_forward.2} parent=35 // pred_fallthru
        _
      // Predicated region
      $region41: #{interaction_forward.2} parent=35 // pred_check
        %p266 = pneg %p60
      $region42: #{interaction_forward.2} parent=35 // pred_check_branch
        %268 = sbr.rel (%p266) target = $region44
      $region43: #{interaction_forward.2} parent=35 // pred_region
        %s269 = smul.u32 32, %s14
        %p270 = scmp.lt.s32.totalorder %s269, 63
        %s271 = scalar_select %p270, %s269, 63
        %s272 = smul.addr %s271, 8
        %s273 = scalar_lea.vmem %s1, %s272
        %s274 = smul.u32 32, %s14
      $region44: #{interaction_forward.2} parent=35 // pred_fallthru
        _
      // Predicated region
      $region45: #{interaction_forward.2} parent=35 // pred_check
        %p275 = pneg %p86
      $region46: #{interaction_forward.2} parent=35 // pred_check_branch
        %277 = sbr.rel (%p275) target = $region48
      $region47: #{interaction_forward.2} parent=35 // pred_region
        %s278 = smul.u32 32, %s14
        %p279 = scmp.lt.s32.totalorder %s278, 63
        %s280 = scalar_select %p279, %s278, 63
        %s281 = smul.addr %s280, 8
        %s282 = scalar_lea.vmem %s2, %s281
        %s283 = smul.u32 32, %s14
      $region48: #{interaction_forward.2} parent=35 // pred_fallthru
        _
    $region36: #{interaction_forward.2} parent=5 // pred_fallthru
      _
    %p284 = scmp.le.s32.totalorder 1, %s14
    %p285 = scmp.lt.s32.totalorder %s14, 3
    %p286 = pnand %p284, %p285
    %p287 = pneg %p286
    // Predicated region
    $region49: #{interaction_forward.2} parent=5 // pred_check
      _
    $region50: #{interaction_forward.2} parent=5 // pred_check_branch
      %289 = sbr.rel (%p286) target = $region52
    $region51: #{interaction_forward.2} parent=5 // pred_region
      %s290 = ssub.s32 %s14, 1
      %s291 = smul.u32 32, %s19
      %p292 = scmp.lt.s32.totalorder %s291, 63
      %s293 = scalar_select %p292, %s291, 63
      %s294 = smul.addr %s293, 4
      %s295 = scalar_lea.vmem %s0, %s294
      %p296 = pneg %p40
      %p297 = pneg %p37
      %s298 = smul.u32 32, %s19
      %p299 = scmp.lt.s32.totalorder %s298, 63
      %s300 = scalar_select %p299, %s298, 63
      %s301 = smul.addr %s300, 8
      %s302 = scalar_lea.vmem %s1, %s301
      %p303 = pneg %p66
      %p304 = pneg %p63
      %s305 = smul.u32 32, %s19
      %p306 = scmp.lt.s32.totalorder %s305, 63
      %s307 = scalar_select %p306, %s305, 63
      %s308 = smul.addr %s307, 8
      %s309 = scalar_lea.vmem %s2, %s308
      %p310 = pneg %p92
      %p311 = pneg %p89
      %p312 = pneg %p113
      %p313 = pneg %p110
      %p314 = pneg %p134
      %p315 = pneg %p131
      %p316 = pneg %p155
      %p317 = pneg %p152
      %p318 = pneg %p176
      %p319 = pneg %p173
      %p320 = pneg %p197
      %p321 = pneg %p194
      %p322 = pneg %p223
      %p323 = pneg %p220
      %s324 = smul.u32 32, %s19
      %p325 = scmp.lt.s32.totalorder %s324, 63
      %s326 = scalar_select %p325, %s324, 63
      %s327 = smul.addr %s326, 8
      %s328 = scalar_lea.vmem %s8, %s327
      %s329 = smul.u32 32, %s19
      %p330 = scmp.lt.s32.totalorder %s329, 63
      %s331 = scalar_select %p330, %s329, 63
      %s332 = smul.addr %s331, 4
      %s333 = scalar_lea.vmem %s0, %s332
      %s334 = smul.u32 32, %s19
      %s335 = smul.u32 32, %s19
      %p336 = scmp.lt.s32.totalorder %s335, 63
      %s337 = scalar_select %p336, %s335, 63
      %s338 = smul.addr %s337, 8
      %s339 = scalar_lea.vmem %s1, %s338
      %s340 = smul.u32 32, %s19
      %s341 = smul.u32 32, %s19
      %p342 = scmp.lt.s32.totalorder %s341, 63
      %s343 = scalar_select %p342, %s341, 63
      %s344 = smul.addr %s343, 8
      %s345 = scalar_lea.vmem %s2, %s344
      %s346 = smul.u32 32, %s19
      %s347 = smul.u32 32, %s19
      %p348 = scmp.lt.s32.totalorder %s347, 63
      %s349 = scalar_select %p348, %s347, 63
      %s350 = smul.addr %s349, 8
      %s351 = scalar_lea.vmem %s8, %s350
      %s352 = smul.u32 32, %s19
      %v354 = vld [vmem:[%s333] sm:$0xf]
      %v355 = vld [vmem:[%s333 + $0x4] sm:$0xf]
      %v356 = vld [vmem:[%s333 + $0x8] sm:$0xf]
      %v357 = vld [vmem:[%s333 + $0xc] sm:$0xf]
      %v358 = vld [vmem:[%s333 + $0x10] sm:$0xf]
      %v359 = vld [vmem:[%s333 + $0x14] sm:$0xf]
      %v360 = vld [vmem:[%s333 + $0x18] sm:$0xf]
      %v361 = vld [vmem:[%s333 + $0x1c] sm:$0xf]
      %v362 = vld [vmem:[%s333 + $0x20] sm:$0xf]
      %v363 = vld [vmem:[%s333 + $0x24] sm:$0xf]
      %v364 = vld [vmem:[%s333 + $0x28] sm:$0xf]
      %v365 = vld [vmem:[%s333 + $0x2c] sm:$0xf]
      %v366 = vld [vmem:[%s333 + $0x30] sm:$0xf]
      %v367 = vld [vmem:[%s333 + $0x34] sm:$0xf]
      %v368 = vld [vmem:[%s333 + $0x38] sm:$0xf]
      %v369 = vld [vmem:[%s333 + $0x3c] sm:$0xf]
      %v370 = vld [vmem:[%s333 + $0x40] sm:$0xf]
      %v371 = vld [vmem:[%s333 + $0x44] sm:$0xf]
      %v372 = vld [vmem:[%s333 + $0x48] sm:$0xf]
      %v373 = vld [vmem:[%s333 + $0x4c] sm:$0xf]
      %v374 = vld [vmem:[%s333 + $0x50] sm:$0xf]
      %v375 = vld [vmem:[%s333 + $0x54] sm:$0xf]
      %v376 = vld [vmem:[%s333 + $0x58] sm:$0xf]
      %v377 = vld [vmem:[%s333 + $0x5c] sm:$0xf]
      %v378 = vld [vmem:[%s333 + $0x60] sm:$0xf]
      %v379 = vld [vmem:[%s333 + $0x64] sm:$0xf]
      %v380 = vld [vmem:[%s333 + $0x68] sm:$0xf]
      %v381 = vld [vmem:[%s333 + $0x6c] sm:$0xf]
      %v382 = vld [vmem:[%s333 + $0x70] sm:$0xf]
      %v383 = vld [vmem:[%s333 + $0x74] sm:$0xf]
      %v384 = vld [vmem:[%s333 + $0x78] sm:$0xf]
      %v385 = vld [vmem:[%s333 + $0x7c] sm:$0xf]
      %v386 = vld [vmem:[%s339] sm:$0xff]
      %v387 = vld [vmem:[%s339 + $0x8] sm:$0xff]
      %v388 = vld [vmem:[%s339 + $0x10] sm:$0xff]
      %v389 = vld [vmem:[%s339 + $0x18] sm:$0xff]
      %v390 = vld [vmem:[%s339 + $0x20] sm:$0xff]
      %v391 = vld [vmem:[%s339 + $0x28] sm:$0xff]
      %v392 = vld [vmem:[%s339 + $0x30] sm:$0xff]
      %v393 = vld [vmem:[%s339 + $0x38] sm:$0xff]
      %v394 = vld [vmem:[%s339 + $0x40] sm:$0xff]
      %v395 = vld [vmem:[%s339 + $0x48] sm:$0xff]
      %v396 = vld [vmem:[%s339 + $0x50] sm:$0xff]
      %v397 = vld [vmem:[%s339 + $0x58] sm:$0xff]
      %v398 = vld [vmem:[%s339 + $0x60] sm:$0xff]
      %v399 = vld [vmem:[%s339 + $0x68] sm:$0xff]
      %v400 = vld [vmem:[%s339 + $0x70] sm:$0xff]
      %v401 = vld [vmem:[%s339 + $0x78] sm:$0xff]
      %v402 = vld [vmem:[%s339 + $0x80] sm:$0xff]
      %v403 = vld [vmem:[%s339 + $0x88] sm:$0xff]
      %v404 = vld [vmem:[%s339 + $0x90] sm:$0xff]
      %v405 = vld [vmem:[%s339 + $0x98] sm:$0xff]
      %v406 = vld [vmem:[%s339 + $0xa0] sm:$0xff]
      %v407 = vld [vmem:[%s339 + $0xa8] sm:$0xff]
      %v408 = vld [vmem:[%s339 + $0xb0] sm:$0xff]
      %v409 = vld [vmem:[%s339 + $0xb8] sm:$0xff]
      %v410 = vld [vmem:[%s339 + $0xc0] sm:$0xff]
      %v411 = vld [vmem:[%s339 + $0xc8] sm:$0xff]
      %v412 = vld [vmem:[%s339 + $0xd0] sm:$0xff]
      %v413 = vld [vmem:[%s339 + $0xd8] sm:$0xff]
      %v414 = vld [vmem:[%s339 + $0xe0] sm:$0xff]
      %v415 = vld [vmem:[%s339 + $0xe8] sm:$0xff]
      %v416 = vld [vmem:[%s339 + $0xf0] sm:$0xff]
      %v417 = vld [vmem:[%s339 + $0xf8] sm:$0xff]
      %v418 = vpack.c.bf16 %v387, %v386
      %v419 = vpack.c.bf16 %v389, %v388
      %v420 = vpack.c.bf16 %v391, %v390
      %v421 = vpack.c.bf16 %v393, %v392
      %v422 = vpack.c.bf16 %v395, %v394
      %v423 = vpack.c.bf16 %v397, %v396
      %v424 = vpack.c.bf16 %v399, %v398
      %v425 = vpack.c.bf16 %v401, %v400
      %v426 = vpack.c.bf16 %v403, %v402
      %v427 = vpack.c.bf16 %v405, %v404
      %v428 = vpack.c.bf16 %v407, %v406
      %v429 = vpack.c.bf16 %v409, %v408
      %v430 = vpack.c.bf16 %v411, %v410
      %v431 = vpack.c.bf16 %v413, %v412
      %v432 = vpack.c.bf16 %v415, %v414
      %v433 = vpack.c.bf16 %v417, %v416
      %v434 = vld [vmem:[%s3] sm:$0xf]
      %v435 = vld [vmem:[%s3 + $0x4] sm:$0xf]
      %v436 = vld [vmem:[%s3 + $0x8] sm:$0xf]
      %v437 = vld [vmem:[%s3 + $0xc] sm:$0xf]
      %v438 = vld [vmem:[%s4] sm:$0xf]
      %v439 = vld [vmem:[%s4 + $0x4] sm:$0xf]
      %v442 = vunpack.c.l.b16 %v438
      %v443 = vunpack.c.l.b16 %v439
      %v444 = vpack.c.b16 %v443, %v442
      %vm446 = vcmask 130048
      %v448 = vsel %vm446, %v418, 0
      %v451 = vsel %vm446, %v419, 0
      %v454 = vsel %vm446, %v420, 0
      %v457 = vsel %vm446, %v421, 0
      %v460 = vsel %vm446, %v422, 0
      %v463 = vsel %vm446, %v423, 0
      %v466 = vsel %vm446, %v424, 0
      %v469 = vsel %vm446, %v425, 0
      %v472 = vsel %vm446, %v426, 0
      %v475 = vsel %vm446, %v427, 0
      %v478 = vsel %vm446, %v428, 0
      %v481 = vsel %vm446, %v429, 0
      %v484 = vsel %vm446, %v430, 0
      %v487 = vsel %vm446, %v431, 0
      %v490 = vsel %vm446, %v432, 0
      %v493 = vsel %vm446, %v433, 0
      %495 = vmatprep.subr.bf16.mxu0 0
      %496 = vmatpush1.bf16.msra.mxu0 %v444
      %497 = vmatprep.subr.bf16.mxu0 0
      %498 = vmatpush1.bf16.msra.mxu0 0
      %499 = vmatprep.subr.bf16.mxu0 0
      %500 = vmatpush1.bf16.msra.mxu0 0
      %501 = vmatprep.subr.bf16.mxu0 0
      %502 = vmatpush1.bf16.msra.mxu0 0
      %503 = vmatprep.subr.bf16.mxu0 0
      %504 = vmatpush1.bf16.msra.mxu0 0
      %505 = vmatprep.subr.bf16.mxu0 0
      %506 = vmatpush1.bf16.msra.mxu0 0
      %507 = vmatprep.subr.bf16.mxu0 0
      %508 = vmatpush1.bf16.msra.mxu0 0
      %509 = vmatprep.subr.bf16.mxu0 0
      %510 = vmatpush1.bf16.msra.mxu0 0
      %511 = vmatprep.subr.bf16.mxu0 0
      %512 = vmatpush1.bf16.msra.mxu0 0
      %513 = vmatprep.subr.bf16.mxu0 0
      %514 = vmatpush1.bf16.msra.mxu0 0
      %515 = vmatprep.subr.bf16.mxu0 0
      %516 = vmatpush1.bf16.msra.mxu0 0
      %517 = vmatprep.subr.bf16.mxu0 0
      %518 = vmatpush1.bf16.msra.mxu0 0
      %519 = vmatprep.subr.bf16.mxu0 0
      %520 = vmatpush1.bf16.msra.mxu0 0
      %521 = vmatprep.subr.bf16.mxu0 0
      %522 = vmatpush1.bf16.msra.mxu0 0
      %523 = vmatprep.subr.bf16.mxu0 0
      %524 = vmatpush1.bf16.msra.mxu0 0
      %525 = vmatprep.subr.bf16.mxu0 0
      %526 = vmatpush1.bf16.msra.mxu0 0
      %527 = vmatprep.mubr.bf16.mxu0 0
      %528 = vmatmul.mubr.bf16.gmra.mrb[0].mxu0 %v448
      %v529 = vpop.f32.mrb[0].mxu0
      %v530 = vadd.f32 0.0, %v529
      %v531 = vpop.f32.mrb[0].mxu0
      %v532 = vpop.f32.mrb[0].mxu0
      %v533 = vadd.f32 0.0, %v532
      %v534 = vpop.f32.mrb[0].mxu0
      %535 = vmatprep.mubr.bf16.mxu0 0
      %536 = vmatmul.mubr.bf16.gmra.mrb[0].mxu0 %v451
      %v537 = vpop.f32.mrb[0].mxu0
      %v538 = vadd.f32 0.0, %v537
      %v539 = vpop.f32.mrb[0].mxu0
      %v540 = vpop.f32.mrb[0].mxu0
      %v541 = vadd.f32 0.0, %v540
      %v542 = vpop.f32.mrb[0].mxu0
      %543 = vmatprep.mubr.bf16.mxu0 0
      %544 = vmatmul.mubr.bf16.gmra.mrb[0].mxu0 %v454
      %v545 = vpop.f32.mrb[0].mxu0
      %v546 = vadd.f32 0.0, %v545
      %v547 = vpop.f32.mrb[0].mxu0
      %v548 = vpop.f32.mrb[0].mxu0
      %v549 = vadd.f32 0.0, %v548
      %v550 = vpop.f32.mrb[0].mxu0
      %551 = vmatprep.mubr.bf16.mxu0 0
      %552 = vmatmul.mubr.bf16.gmra.mrb[0].mxu0 %v457
      %v553 = vpop.f32.mrb[0].mxu0
      %v554 = vadd.f32 0.0, %v553
      %v555 = vpop.f32.mrb[0].mxu0
      %v556 = vpop.f32.mrb[0].mxu0
      %v557 = vadd.f32 0.0, %v556
      %v558 = vpop.f32.mrb[0].mxu0
      %559 = vmatprep.mubr.bf16.mxu0 0
      %560 = vmatmul.mubr.bf16.gmra.mrb[0].mxu0 %v460
      %v561 = vpop.f32.mrb[0].mxu0
      %v562 = vadd.f32 0.0, %v561
      %v563 = vpop.f32.mrb[0].mxu0
      %v564 = vpop.f32.mrb[0].mxu0
      %v565 = vadd.f32 0.0, %v564
      %v566 = vpop.f32.mrb[0].mxu0
      %567 = vmatprep.mubr.bf16.mxu0 0
      %568 = vmatmul.mubr.bf16.gmra.mrb[0].mxu0 %v463
      %v569 = vpop.f32.mrb[0].mxu0
      %v570 = vadd.f32 0.0, %v569
      %v571 = vpop.f32.mrb[0].mxu0
      %v572 = vpop.f32.mrb[0].mxu0
      %v573 = vadd.f32 0.0, %v572
      %v574 = vpop.f32.mrb[0].mxu0
      %575 = vmatprep.mubr.bf16.mxu0 0
      %576 = vmatmul.mubr.bf16.gmra.mrb[0].mxu0 %v466
      %v577 = vpop.f32.mrb[0].mxu0
      %v578 = vadd.f32 0.0, %v577
      %v579 = vpop.f32.mrb[0].mxu0
      %v580 = vpop.f32.mrb[0].mxu0
      %v581 = vadd.f32 0.0, %v580
      %v582 = vpop.f32.mrb[0].mxu0
      %583 = vmatprep.mubr.bf16.mxu0 0
      %584 = vmatmul.mubr.bf16.gmra.mrb[0].mxu0 %v469
      %v585 = vpop.f32.mrb[0].mxu0
      %v586 = vadd.f32 0.0, %v585
      %v587 = vpop.f32.mrb[0].mxu0
      %v588 = vpop.f32.mrb[0].mxu0
      %v589 = vadd.f32 0.0, %v588
      %v590 = vpop.f32.mrb[0].mxu0
      %591 = vmatprep.mubr.bf16.mxu0 0
      %592 = vmatmul.mubr.bf16.gmra.mrb[0].mxu0 %v472
      %v593 = vpop.f32.mrb[0].mxu0
      %v594 = vadd.f32 0.0, %v593
      %v595 = vpop.f32.mrb[0].mxu0
      %v596 = vpop.f32.mrb[0].mxu0
      %v597 = vadd.f32 0.0, %v596
      %v598 = vpop.f32.mrb[0].mxu0
      %599 = vmatprep.mubr.bf16.mxu0 0
      %600 = vmatmul.mubr.bf16.gmra.mrb[0].mxu0 %v475
      %v601 = vpop.f32.mrb[0].mxu0
      %v602 = vadd.f32 0.0, %v601
      %v603 = vpop.f32.mrb[0].mxu0
      %v604 = vpop.f32.mrb[0].mxu0
      %v605 = vadd.f32 0.0, %v604
      %v606 = vpop.f32.mrb[0].mxu0
      %607 = vmatprep.mubr.bf16.mxu0 0
      %608 = vmatmul.mubr.bf16.gmra.mrb[0].mxu0 %v478
      %v609 = vpop.f32.mrb[0].mxu0
      %v610 = vadd.f32 0.0, %v609
      %v611 = vpop.f32.mrb[0].mxu0
      %v612 = vpop.f32.mrb[0].mxu0
      %v613 = vadd.f32 0.0, %v612
      %v614 = vpop.f32.mrb[0].mxu0
      %615 = vmatprep.mubr.bf16.mxu0 0
      %616 = vmatmul.mubr.bf16.gmra.mrb[0].mxu0 %v481
      %v617 = vpop.f32.mrb[0].mxu0
      %v618 = vadd.f32 0.0, %v617
      %v619 = vpop.f32.mrb[0].mxu0
      %v620 = vpop.f32.mrb[0].mxu0
      %v621 = vadd.f32 0.0, %v620
      %v622 = vpop.f32.mrb[0].mxu0
      %623 = vmatprep.mubr.bf16.mxu0 0
      %624 = vmatmul.mubr.bf16.gmra.mrb[0].mxu0 %v484
      %v625 = vpop.f32.mrb[0].mxu0
      %v626 = vadd.f32 0.0, %v625
      %v627 = vpop.f32.mrb[0].mxu0
      %v628 = vpop.f32.mrb[0].mxu0
      %v629 = vadd.f32 0.0, %v628
      %v630 = vpop.f32.mrb[0].mxu0
      %631 = vmatprep.mubr.bf16.mxu0 0
      %632 = vmatmul.mubr.bf16.gmra.mrb[0].mxu0 %v487
      %v633 = vpop.f32.mrb[0].mxu0
      %v634 = vadd.f32 0.0, %v633
      %v635 = vpop.f32.mrb[0].mxu0
      %v636 = vpop.f32.mrb[0].mxu0
      %v637 = vadd.f32 0.0, %v636
      %v638 = vpop.f32.mrb[0].mxu0
      %639 = vmatprep.mubr.bf16.mxu0 0
      %640 = vmatmul.mubr.bf16.gmra.mrb[0].mxu0 %v490
      %v641 = vpop.f32.mrb[0].mxu0
      %v642 = vadd.f32 0.0, %v641
      %v643 = vpop.f32.mrb[0].mxu0
      %v644 = vpop.f32.mrb[0].mxu0
      %v645 = vadd.f32 0.0, %v644
      %v646 = vpop.f32.mrb[0].mxu0
      %647 = vmatprep.mubr.bf16.mxu0 0
      %648 = vmatmul.mubr.bf16.gmra.mrb[0].mxu0 %v493
      %v649 = vpop.f32.mrb[0].mxu0
      %v650 = vadd.f32 0.0, %v649
      %v651 = vpop.f32.mrb[0].mxu0
      %v652 = vpop.f32.mrb[0].mxu0
      %v653 = vadd.f32 0.0, %v652
      %v654 = vpop.f32.mrb[0].mxu0
      %655 = vdwg.mxu0
      %v688 = vunpack.c.l.b16 %v354
      %v689 = vunpack.c.l.b16 %v355
      %v690 = vunpack.c.l.b16 %v356
      %v691 = vunpack.c.l.b16 %v357
      %v692 = vunpack.c.l.b16 %v358
      %v693 = vunpack.c.l.b16 %v359
      %v694 = vunpack.c.l.b16 %v360
      %v695 = vunpack.c.l.b16 %v361
      %v696 = vunpack.c.l.b16 %v362
      %v697 = vunpack.c.l.b16 %v363
      %v698 = vunpack.c.l.b16 %v364
      %v699 = vunpack.c.l.b16 %v365
      %v700 = vunpack.c.l.b16 %v366
      %v701 = vunpack.c.l.b16 %v367
      %v702 = vunpack.c.l.b16 %v368
      %v703 = vunpack.c.l.b16 %v369
      %v704 = vunpack.c.l.b16 %v370
      %v705 = vunpack.c.l.b16 %v371
      %v706 = vunpack.c.l.b16 %v372
      %v707 = vunpack.c.l.b16 %v373
      %v708 = vunpack.c.l.b16 %v374
      %v709 = vunpack.c.l.b16 %v375
      %v710 = vunpack.c.l.b16 %v376
      %v711 = vunpack.c.l.b16 %v377
      %v712 = vunpack.c.l.b16 %v378
      %v713 = vunpack.c.l.b16 %v379
      %v714 = vunpack.c.l.b16 %v380
      %v715 = vunpack.c.l.b16 %v381
      %v716 = vunpack.c.l.b16 %v382
      %v717 = vunpack.c.l.b16 %v383
      %v718 = vunpack.c.l.b16 %v384
      %v719 = vunpack.c.l.b16 %v385
      %v720 = vpack.c.b16 %v689, %v688
      %v721 = vpack.c.b16 %v691, %v690
      %v722 = vpack.c.b16 %v693, %v692
      %v723 = vpack.c.b16 %v695, %v694
      %v724 = vpack.c.b16 %v697, %v696
      %v725 = vpack.c.b16 %v699, %v698
      %v726 = vpack.c.b16 %v701, %v700
      %v727 = vpack.c.b16 %v703, %v702
      %v728 = vpack.c.b16 %v705, %v704
      %v729 = vpack.c.b16 %v707, %v706
      %v730 = vpack.c.b16 %v709, %v708
      %v731 = vpack.c.b16 %v711, %v710
      %v732 = vpack.c.b16 %v713, %v712
      %v733 = vpack.c.b16 %v715, %v714
      %v734 = vpack.c.b16 %v717, %v716
      %v735 = vpack.c.b16 %v719, %v718
      %v740 = vunpack.c.l.b16 %v434
      %v741 = vunpack.c.l.b16 %v435
      %v742 = vunpack.c.l.b16 %v436
      %v743 = vunpack.c.l.b16 %v437
      %v744 = vpack.c.b16 %v741, %v740
      %v745 = vpack.c.b16 %v743, %v742
      %vm748 = vcmask 261120
      %v750 = vsel %vm748, %v720, 0
      %v753 = vsel %vm748, %v721, 0
      %v756 = vsel %vm748, %v722, 0
      %v759 = vsel %vm748, %v723, 0
      %v762 = vsel %vm748, %v724, 0
      %v765 = vsel %vm748, %v725, 0
      %v768 = vsel %vm748, %v726, 0
      %v771 = vsel %vm748, %v727, 0
      %v774 = vsel %vm748, %v728, 0
      %v777 = vsel %vm748, %v729, 0
      %v780 = vsel %vm748, %v730, 0
      %v783 = vsel %vm748, %v731, 0
      %v786 = vsel %vm748, %v732, 0
      %v789 = vsel %vm748, %v733, 0
      %v792 = vsel %vm748, %v734, 0
      %v795 = vsel %vm748, %v735, 0
      %797 = vmatprep.subr.bf16.mxu0 0
      %798 = vmatpush1.bf16.msra.mxu0 %v744
      %799 = vmatprep.subr.bf16.mxu0 0
      %800 = vmatpush1.bf16.msra.mxu0 %v745
      %801 = vmatprep.subr.bf16.mxu0 0
      %802 = vmatpush1.bf16.msra.mxu0 0
      %803 = vmatprep.subr.bf16.mxu0 0
      %804 = vmatpush1.bf16.msra.mxu0 0
      %805 = vmatprep.subr.bf16.mxu0 0
      %806 = vmatpush1.bf16.msra.mxu0 0
      %807 = vmatprep.subr.bf16.mxu0 0
      %808 = vmatpush1.bf16.msra.mxu0 0
      %809 = vmatprep.subr.bf16.mxu0 0
      %810 = vmatpush1.bf16.msra.mxu0 0
      %811 = vmatprep.subr.bf16.mxu0 0
      %812 = vmatpush1.bf16.msra.mxu0 0
      %813 = vmatprep.subr.bf16.mxu0 0
      %814 = vmatpush1.bf16.msra.mxu0 0
      %815 = vmatprep.subr.bf16.mxu0 0
      %816 = vmatpush1.bf16.msra.mxu0 0
      %817 = vmatprep.subr.bf16.mxu0 0
      %818 = vmatpush1.bf16.msra.mxu0 0
      %819 = vmatprep.subr.bf16.mxu0 0
      %820 = vmatpush1.bf16.msra.mxu0 0
      %821 = vmatprep.subr.bf16.mxu0 0
      %822 = vmatpush1.bf16.msra.mxu0 0
      %823 = vmatprep.subr.bf16.mxu0 0
      %824 = vmatpush1.bf16.msra.mxu0 0
      %825 = vmatprep.subr.bf16.mxu0 0
      %826 = vmatpush1.bf16.msra.mxu0 0
      %827 = vmatprep.subr.bf16.mxu0 0
      %828 = vmatpush1.bf16.msra.mxu0 0
      %829 = vmatprep.mubr.bf16.mxu0 0
      %830 = vmatmul.mubr.bf16.gmra.mrb[0].mxu0 %v750
      %v831 = vpop.f32.mrb[0].mxu0
      %v832 = vadd.f32 %v530, %v831
      %v833 = vpop.f32.mrb[0].mxu0
      %v834 = vpop.f32.mrb[0].mxu0
      %v835 = vadd.f32 %v533, %v834
      %v836 = vpop.f32.mrb[0].mxu0
      %837 = vmatprep.mubr.bf16.mxu0 0
      %838 = vmatmul.mubr.bf16.gmra.mrb[0].mxu0 %v753
      %v839 = vpop.f32.mrb[0].mxu0
      %v840 = vadd.f32 %v538, %v839
      %v841 = vpop.f32.mrb[0].mxu0
      %v842 = vpop.f32.mrb[0].mxu0
      %v843 = vadd.f32 %v541, %v842
      %v844 = vpop.f32.mrb[0].mxu0
      %845 = vmatprep.mubr.bf16.mxu0 0
      %846 = vmatmul.mubr.bf16.gmra.mrb[0].mxu0 %v756
      %v847 = vpop.f32.mrb[0].mxu0
      %v848 = vadd.f32 %v546, %v847
      %v849 = vpop.f32.mrb[0].mxu0
      %v850 = vpop.f32.mrb[0].mxu0
      %v851 = vadd.f32 %v549, %v850
      %v852 = vpop.f32.mrb[0].mxu0
      %853 = vmatprep.mubr.bf16.mxu0 0
      %854 = vmatmul.mubr.bf16.gmra.mrb[0].mxu0 %v759
      %v855 = vpop.f32.mrb[0].mxu0
      %v856 = vadd.f32 %v554, %v855
      %v857 = vpop.f32.mrb[0].mxu0
      %v858 = vpop.f32.mrb[0].mxu0
      %v859 = vadd.f32 %v557, %v858
      %v860 = vpop.f32.mrb[0].mxu0
      %861 = vmatprep.mubr.bf16.mxu0 0
      %862 = vmatmul.mubr.bf16.gmra.mrb[0].mxu0 %v762
      %v863 = vpop.f32.mrb[0].mxu0
      %v864 = vadd.f32 %v562, %v863
      %v865 = vpop.f32.mrb[0].mxu0
      %v866 = vpop.f32.mrb[0].mxu0
      %v867 = vadd.f32 %v565, %v866
      %v868 = vpop.f32.mrb[0].mxu0
      %869 = vmatprep.mubr.bf16.mxu0 0
      %870 = vmatmul.mubr.bf16.gmra.mrb[0].mxu0 %v765
      %v871 = vpop.f32.mrb[0].mxu0
      %v872 = vadd.f32 %v570, %v871
      %v873 = vpop.f32.mrb[0].mxu0
      %v874 = vpop.f32.mrb[0].mxu0
      %v875 = vadd.f32 %v573, %v874
      %v876 = vpop.f32.mrb[0].mxu0
      %877 = vmatprep.mubr.bf16.mxu0 0
      %878 = vmatmul.mubr.bf16.gmra.mrb[0].mxu0 %v768
      %v879 = vpop.f32.mrb[0].mxu0
      %v880 = vadd.f32 %v578, %v879
      %v881 = vpop.f32.mrb[0].mxu0
      %v882 = vpop.f32.mrb[0].mxu0
      %v883 = vadd.f32 %v581, %v882
      %v884 = vpop.f32.mrb[0].mxu0
      %885 = vmatprep.mubr.bf16.mxu0 0
      %886 = vmatmul.mubr.bf16.gmra.mrb[0].mxu0 %v771
      %v887 = vpop.f32.mrb[0].mxu0
      %v888 = vadd.f32 %v586, %v887
      %v889 = vpop.f32.mrb[0].mxu0
      %v890 = vpop.f32.mrb[0].mxu0
      %v891 = vadd.f32 %v589, %v890
      %v892 = vpop.f32.mrb[0].mxu0
      %893 = vmatprep.mubr.bf16.mxu0 0
      %894 = vmatmul.mubr.bf16.gmra.mrb[0].mxu0 %v774
      %v895 = vpop.f32.mrb[0].mxu0
      %v896 = vadd.f32 %v594, %v895
      %v897 = vpop.f32.mrb[0].mxu0
      %v898 = vpop.f32.mrb[0].mxu0
      %v899 = vadd.f32 %v597, %v898
      %v900 = vpop.f32.mrb[0].mxu0
      %901 = vmatprep.mubr.bf16.mxu0 0
      %902 = vmatmul.mubr.bf16.gmra.mrb[0].mxu0 %v777
      %v903 = vpop.f32.mrb[0].mxu0
      %v904 = vadd.f32 %v602, %v903
      %v905 = vpop.f32.mrb[0].mxu0
      %v906 = vpop.f32.mrb[0].mxu0
      %v907 = vadd.f32 %v605, %v906
      %v908 = vpop.f32.mrb[0].mxu0
      %909 = vmatprep.mubr.bf16.mxu0 0
      %910 = vmatmul.mubr.bf16.gmra.mrb[0].mxu0 %v780
      %v911 = vpop.f32.mrb[0].mxu0
      %v912 = vadd.f32 %v610, %v911
      %v913 = vpop.f32.mrb[0].mxu0
      %v914 = vpop.f32.mrb[0].mxu0
      %v915 = vadd.f32 %v613, %v914
      %v916 = vpop.f32.mrb[0].mxu0
      %917 = vmatprep.mubr.bf16.mxu0 0
      %918 = vmatmul.mubr.bf16.gmra.mrb[0].mxu0 %v783
      %v919 = vpop.f32.mrb[0].mxu0
      %v920 = vadd.f32 %v618, %v919
      %v921 = vpop.f32.mrb[0].mxu0
      %v922 = vpop.f32.mrb[0].mxu0
      %v923 = vadd.f32 %v621, %v922
      %v924 = vpop.f32.mrb[0].mxu0
      %925 = vmatprep.mubr.bf16.mxu0 0
      %926 = vmatmul.mubr.bf16.gmra.mrb[0].mxu0 %v786
      %v927 = vpop.f32.mrb[0].mxu0
      %v928 = vadd.f32 %v626, %v927
      %v929 = vpop.f32.mrb[0].mxu0
      %v930 = vpop.f32.mrb[0].mxu0
      %v931 = vadd.f32 %v629, %v930
      %v932 = vpop.f32.mrb[0].mxu0
      %933 = vmatprep.mubr.bf16.mxu0 0
      %934 = vmatmul.mubr.bf16.gmra.mrb[0].mxu0 %v789
      %v935 = vpop.f32.mrb[0].mxu0
      %v936 = vadd.f32 %v634, %v935
      %v937 = vpop.f32.mrb[0].mxu0
      %v938 = vpop.f32.mrb[0].mxu0
      %v939 = vadd.f32 %v637, %v938
      %v940 = vpop.f32.mrb[0].mxu0
      %941 = vmatprep.mubr.bf16.mxu0 0
      %942 = vmatmul.mubr.bf16.gmra.mrb[0].mxu0 %v792
      %v943 = vpop.f32.mrb[0].mxu0
      %v944 = vadd.f32 %v642, %v943
      %v945 = vpop.f32.mrb[0].mxu0
      %v946 = vpop.f32.mrb[0].mxu0
      %v947 = vadd.f32 %v645, %v946
      %v948 = vpop.f32.mrb[0].mxu0
      %949 = vmatprep.mubr.bf16.mxu0 0
      %950 = vmatmul.mubr.bf16.gmra.mrb[0].mxu0 %v795
      %v951 = vpop.f32.mrb[0].mxu0
      %v952 = vadd.f32 %v650, %v951
      %v953 = vpop.f32.mrb[0].mxu0
      %v954 = vpop.f32.mrb[0].mxu0
      %v955 = vadd.f32 %v653, %v954
      %v956 = vpop.f32.mrb[0].mxu0
      %957 = vdwg.mxu0
      %v958 = vld [vmem:[%s5] sm:$0x1]
      %v960 = vlaneseq
      %v961 = vshrl.u32 %v960, 7
      %v962 = vsub.s32 0, %v961
      %v963 = vrot.slane %v958, %v962
      %v965 = vadd.f32 %v832, %v963
      %v966 = vadd.f32 %v835, %v963
      %v967 = vadd.f32 %v840, %v963
      %v968 = vadd.f32 %v843, %v963
      %v969 = vadd.f32 %v848, %v963
      %v970 = vadd.f32 %v851, %v963
      %v971 = vadd.f32 %v856, %v963
      %v972 = vadd.f32 %v859, %v963
      %v973 = vadd.f32 %v864, %v963
      %v974 = vadd.f32 %v867, %v963
      %v975 = vadd.f32 %v872, %v963
      %v976 = vadd.f32 %v875, %v963
      %v977 = vadd.f32 %v880, %v963
      %v978 = vadd.f32 %v883, %v963
      %v979 = vadd.f32 %v888, %v963
      %v980 = vadd.f32 %v891, %v963
      %v981 = vadd.f32 %v896, %v963
      %v982 = vadd.f32 %v899, %v963
      %v983 = vadd.f32 %v904, %v963
      %v984 = vadd.f32 %v907, %v963
      %v985 = vadd.f32 %v912, %v963
      %v986 = vadd.f32 %v915, %v963
      %v987 = vadd.f32 %v920, %v963
      %v988 = vadd.f32 %v923, %v963
      %v989 = vadd.f32 %v928, %v963
      %v990 = vadd.f32 %v931, %v963
      %v991 = vadd.f32 %v936, %v963
      %v992 = vadd.f32 %v939, %v963
      %v993 = vadd.f32 %v944, %v963
      %v994 = vadd.f32 %v947, %v963
      %v995 = vadd.f32 %v952, %v963
      %v996 = vadd.f32 %v955, %v963
      %v997 = vmax.f32 %v965, 0.0
      %v998 = vmax.f32 %v966, 0.0
      %v999 = vmax.f32 %v967, 0.0
      %v1000 = vmax.f32 %v968, 0.0
      %v1001 = vmax.f32 %v969, 0.0
      %v1002 = vmax.f32 %v970, 0.0
      %v1003 = vmax.f32 %v971, 0.0
      %v1004 = vmax.f32 %v972, 0.0
      %v1005 = vmax.f32 %v973, 0.0
      %v1006 = vmax.f32 %v974, 0.0
      %v1007 = vmax.f32 %v975, 0.0
      %v1008 = vmax.f32 %v976, 0.0
      %v1009 = vmax.f32 %v977, 0.0
      %v1010 = vmax.f32 %v978, 0.0
      %v1011 = vmax.f32 %v979, 0.0
      %v1012 = vmax.f32 %v980, 0.0
      %v1013 = vmax.f32 %v981, 0.0
      %v1014 = vmax.f32 %v982, 0.0
      %v1015 = vmax.f32 %v983, 0.0
      %v1016 = vmax.f32 %v984, 0.0
      %v1017 = vmax.f32 %v985, 0.0
      %v1018 = vmax.f32 %v986, 0.0
      %v1019 = vmax.f32 %v987, 0.0
      %v1020 = vmax.f32 %v988, 0.0
      %v1021 = vmax.f32 %v989, 0.0
      %v1022 = vmax.f32 %v990, 0.0
      %v1023 = vmax.f32 %v991, 0.0
      %v1024 = vmax.f32 %v992, 0.0
      %v1025 = vmax.f32 %v993, 0.0
      %v1026 = vmax.f32 %v994, 0.0
      %v1027 = vmax.f32 %v995, 0.0
      %v1028 = vmax.f32 %v996, 0.0
      %v1029 = vand.u32 2147483647, %v965
      %v1030 = vand.u32 2147483647, %v966
      %v1031 = vand.u32 2147483647, %v967
      %v1032 = vand.u32 2147483647, %v968
      %v1033 = vand.u32 2147483647, %v969
      %v1034 = vand.u32 2147483647, %v970
      %v1035 = vand.u32 2147483647, %v971
      %v1036 = vand.u32 2147483647, %v972
      %v1037 = vand.u32 2147483647, %v973
      %v1038 = vand.u32 2147483647, %v974
      %v1039 = vand.u32 2147483647, %v975
      %v1040 = vand.u32 2147483647, %v976
      %v1041 = vand.u32 2147483647, %v977
      %v1042 = vand.u32 2147483647, %v978
      %v1043 = vand.u32 2147483647, %v979
      %v1044 = vand.u32 2147483647, %v980
      %v1045 = vand.u32 2147483647, %v981
      %v1046 = vand.u32 2147483647, %v982
      %v1047 = vand.u32 2147483647, %v983
      %v1048 = vand.u32 2147483647, %v984
      %v1049 = vand.u32 2147483647, %v985
      %v1050 = vand.u32 2147483647, %v986
      %v1051 = vand.u32 2147483647, %v987
      %v1052 = vand.u32 2147483647, %v988
      %v1053 = vand.u32 2147483647, %v989
      %v1054 = vand.u32 2147483647, %v990
      %v1055 = vand.u32 2147483647, %v991
      %v1056 = vand.u32 2147483647, %v992
      %v1057 = vand.u32 2147483647, %v993
      %v1058 = vand.u32 2147483647, %v994
      %v1059 = vand.u32 2147483647, %v995
      %v1060 = vand.u32 2147483647, %v996
      %v1061 = vsub.f32 0.0, %v1029
      %v1062 = vsub.f32 0.0, %v1030
      %v1063 = vsub.f32 0.0, %v1031
      %v1064 = vsub.f32 0.0, %v1032
      %v1065 = vsub.f32 0.0, %v1033
      %v1066 = vsub.f32 0.0, %v1034
      %v1067 = vsub.f32 0.0, %v1035
      %v1068 = vsub.f32 0.0, %v1036
      %v1069 = vsub.f32 0.0, %v1037
      %v1070 = vsub.f32 0.0, %v1038
      %v1071 = vsub.f32 0.0, %v1039
      %v1072 = vsub.f32 0.0, %v1040
      %v1073 = vsub.f32 0.0, %v1041
      %v1074 = vsub.f32 0.0, %v1042
      %v1075 = vsub.f32 0.0, %v1043
      %v1076 = vsub.f32 0.0, %v1044
      %v1077 = vsub.f32 0.0, %v1045
      %v1078 = vsub.f32 0.0, %v1046
      %v1079 = vsub.f32 0.0, %v1047
      %v1080 = vsub.f32 0.0, %v1048
      %v1081 = vsub.f32 0.0, %v1049
      %v1082 = vsub.f32 0.0, %v1050
      %v1083 = vsub.f32 0.0, %v1051
      %v1084 = vsub.f32 0.0, %v1052
      %v1085 = vsub.f32 0.0, %v1053
      %v1086 = vsub.f32 0.0, %v1054
      %v1087 = vsub.f32 0.0, %v1055
      %v1088 = vsub.f32 0.0, %v1056
      %v1089 = vsub.f32 0.0, %v1057
      %v1090 = vsub.f32 0.0, %v1058
      %v1091 = vsub.f32 0.0, %v1059
      %v1092 = vsub.f32 0.0, %v1060
      %v1093 = vmul.f32 %v1061, 1.442695
      %v1094 = vpow.pop %v1093
      %v1095 = vmul.f32 %v1062, 1.442695
      %v1096 = vpow.pop %v1095
      %v1097 = vmul.f32 %v1063, 1.442695
      %v1098 = vpow.pop %v1097
      %v1099 = vmul.f32 %v1064, 1.442695
      %v1100 = vpow.pop %v1099
      %v1101 = vmul.f32 %v1065, 1.442695
      %v1102 = vpow.pop %v1101
      %v1103 = vmul.f32 %v1066, 1.442695
      %v1104 = vpow.pop %v1103
      %v1105 = vmul.f32 %v1067, 1.442695
      %v1106 = vpow.pop %v1105
      %v1107 = vmul.f32 %v1068, 1.442695
      %v1108 = vpow.pop %v1107
      %v1109 = vmul.f32 %v1069, 1.442695
      %v1110 = vpow.pop %v1109
      %v1111 = vmul.f32 %v1070, 1.442695
      %v1112 = vpow.pop %v1111
      %v1113 = vmul.f32 %v1071, 1.442695
      %v1114 = vpow.pop %v1113
      %v1115 = vmul.f32 %v1072, 1.442695
      %v1116 = vpow.pop %v1115
      %v1117 = vmul.f32 %v1073, 1.442695
      %v1118 = vpow.pop %v1117
      %v1119 = vmul.f32 %v1074, 1.442695
      %v1120 = vpow.pop %v1119
      %v1121 = vmul.f32 %v1075, 1.442695
      %v1122 = vpow.pop %v1121
      %v1123 = vmul.f32 %v1076, 1.442695
      %v1124 = vpow.pop %v1123
      %v1125 = vmul.f32 %v1077, 1.442695
      %v1126 = vpow.pop %v1125
      %v1127 = vmul.f32 %v1078, 1.442695
      %v1128 = vpow.pop %v1127
      %v1129 = vmul.f32 %v1079, 1.442695
      %v1130 = vpow.pop %v1129
      %v1131 = vmul.f32 %v1080, 1.442695
      %v1132 = vpow.pop %v1131
      %v1133 = vmul.f32 %v1081, 1.442695
      %v1134 = vpow.pop %v1133
      %v1135 = vmul.f32 %v1082, 1.442695
      %v1136 = vpow.pop %v1135
      %v1137 = vmul.f32 %v1083, 1.442695
      %v1138 = vpow.pop %v1137
      %v1139 = vmul.f32 %v1084, 1.442695
      %v1140 = vpow.pop %v1139
      %v1141 = vmul.f32 %v1085, 1.442695
      %v1142 = vpow.pop %v1141
      %v1143 = vmul.f32 %v1086, 1.442695
      %v1144 = vpow.pop %v1143
      %v1145 = vmul.f32 %v1087, 1.442695
      %v1146 = vpow.pop %v1145
      %v1147 = vmul.f32 %v1088, 1.442695
      %v1148 = vpow.pop %v1147
      %v1149 = vmul.f32 %v1089, 1.442695
      %v1150 = vpow.pop %v1149
      %v1151 = vmul.f32 %v1090, 1.442695
      %v1152 = vpow.pop %v1151
      %v1153 = vmul.f32 %v1091, 1.442695
      %v1154 = vpow.pop %v1153
      %v1155 = vmul.f32 %v1092, 1.442695
      %v1156 = vpow.pop %v1155
      %v1157 = vadd.f32 %v1094, 1.0
      %v1158 = vlog2.pop %v1157
      %v1159 = vmul.f32 %v1158, 0.6931472
      %v1160 = vmul.f32 -0.5, %v1094
      %v1161 = vadd.f32 %v1160, 1.0
      %v1162 = vmul.f32 %v1161, %v1094
      %v1163 = vand.u32 2147483647, %v1094
      %vm1164 = vcmp.lt.f32.partialorder %v1163, 0.0004427343
      %v1165 = vsel %vm1164, %v1162, %v1159
      %v1166 = vadd.f32 %v1096, 1.0
      %v1167 = vlog2.pop %v1166
      %v1168 = vmul.f32 %v1167, 0.6931472
      %v1169 = vmul.f32 -0.5, %v1096
      %v1170 = vadd.f32 %v1169, 1.0
      %v1171 = vmul.f32 %v1170, %v1096
      %v1172 = vand.u32 2147483647, %v1096
      %vm1173 = vcmp.lt.f32.partialorder %v1172, 0.0004427343
      %v1174 = vsel %vm1173, %v1171, %v1168
      %v1175 = vadd.f32 %v1098, 1.0
      %v1176 = vlog2.pop %v1175
      %v1177 = vmul.f32 %v1176, 0.6931472
      %v1178 = vmul.f32 -0.5, %v1098
      %v1179 = vadd.f32 %v1178, 1.0
      %v1180 = vmul.f32 %v1179, %v1098
      %v1181 = vand.u32 2147483647, %v1098
      %vm1182 = vcmp.lt.f32.partialorder %v1181, 0.0004427343
      %v1183 = vsel %vm1182, %v1180, %v1177
      %v1184 = vadd.f32 %v1100, 1.0
      %v1185 = vlog2.pop %v1184
      %v1186 = vmul.f32 %v1185, 0.6931472
      %v1187 = vmul.f32 -0.5, %v1100
      %v1188 = vadd.f32 %v1187, 1.0
      %v1189 = vmul.f32 %v1188, %v1100
      %v1190 = vand.u32 2147483647, %v1100
      %vm1191 = vcmp.lt.f32.partialorder %v1190, 0.0004427343
      %v1192 = vsel %vm1191, %v1189, %v1186
      %v1193 = vadd.f32 %v1102, 1.0
      %v1194 = vlog2.pop %v1193
      %v1195 = vmul.f32 %v1194, 0.6931472
      %v1196 = vmul.f32 -0.5, %v1102
      %v1197 = vadd.f32 %v1196, 1.0
      %v1198 = vmul.f32 %v1197, %v1102
      %v1199 = vand.u32 2147483647, %v1102
      %vm1200 = vcmp.lt.f32.partialorder %v1199, 0.0004427343
      %v1201 = vsel %vm1200, %v1198, %v1195
      %v1202 = vadd.f32 %v1104, 1.0
      %v1203 = vlog2.pop %v1202
      %v1204 = vmul.f32 %v1203, 0.6931472
      %v1205 = vmul.f32 -0.5, %v1104
      %v1206 = vadd.f32 %v1205, 1.0
      %v1207 = vmul.f32 %v1206, %v1104
      %v1208 = vand.u32 2147483647, %v1104
      %vm1209 = vcmp.lt.f32.partialorder %v1208, 0.0004427343
      %v1210 = vsel %vm1209, %v1207, %v1204
      %v1211 = vadd.f32 %v1106, 1.0
      %v1212 = vlog2.pop %v1211
      %v1213 = vmul.f32 %v1212, 0.6931472
      %v1214 = vmul.f32 -0.5, %v1106
      %v1215 = vadd.f32 %v1214, 1.0
      %v1216 = vmul.f32 %v1215, %v1106
      %v1217 = vand.u32 2147483647, %v1106
      %vm1218 = vcmp.lt.f32.partialorder %v1217, 0.0004427343
      %v1219 = vsel %vm1218, %v1216, %v1213
      %v1220 = vadd.f32 %v1108, 1.0
      %v1221 = vlog2.pop %v1220
      %v1222 = vmul.f32 %v1221, 0.6931472
      %v1223 = vmul.f32 -0.5, %v1108
      %v1224 = vadd.f32 %v1223, 1.0
      %v1225 = vmul.f32 %v1224, %v1108
      %v1226 = vand.u32 2147483647, %v1108
      %vm1227 = vcmp.lt.f32.partialorder %v1226, 0.0004427343
      %v1228 = vsel %vm1227, %v1225, %v1222
      %v1229 = vadd.f32 %v1110, 1.0
      %v1230 = vlog2.pop %v1229
      %v1231 = vmul.f32 %v1230, 0.6931472
      %v1232 = vmul.f32 -0.5, %v1110
      %v1233 = vadd.f32 %v1232, 1.0
      %v1234 = vmul.f32 %v1233, %v1110
      %v1235 = vand.u32 2147483647, %v1110
      %vm1236 = vcmp.lt.f32.partialorder %v1235, 0.0004427343
      %v1237 = vsel %vm1236, %v1234, %v1231
      %v1238 = vadd.f32 %v1112, 1.0
      %v1239 = vlog2.pop %v1238
      %v1240 = vmul.f32 %v1239, 0.6931472
      %v1241 = vmul.f32 -0.5, %v1112
      %v1242 = vadd.f32 %v1241, 1.0
      %v1243 = vmul.f32 %v1242, %v1112
      %v1244 = vand.u32 2147483647, %v1112
      %vm1245 = vcmp.lt.f32.partialorder %v1244, 0.0004427343
      %v1246 = vsel %vm1245, %v1243, %v1240
      %v1247 = vadd.f32 %v1114, 1.0
      %v1248 = vlog2.pop %v1247
      %v1249 = vmul.f32 %v1248, 0.6931472
      %v1250 = vmul.f32 -0.5, %v1114
      %v1251 = vadd.f32 %v1250, 1.0
      %v1252 = vmul.f32 %v1251, %v1114
      %v1253 = vand.u32 2147483647, %v1114
      %vm1254 = vcmp.lt.f32.partialorder %v1253, 0.0004427343
      %v1255 = vsel %vm1254, %v1252, %v1249
      %v1256 = vadd.f32 %v1116, 1.0
      %v1257 = vlog2.pop %v1256
      %v1258 = vmul.f32 %v1257, 0.6931472
      %v1259 = vmul.f32 -0.5, %v1116
      %v1260 = vadd.f32 %v1259, 1.0
      %v1261 = vmul.f32 %v1260, %v1116
      %v1262 = vand.u32 2147483647, %v1116
      %vm1263 = vcmp.lt.f32.partialorder %v1262, 0.0004427343
      %v1264 = vsel %vm1263, %v1261, %v1258
      %v1265 = vadd.f32 %v1118, 1.0
      %v1266 = vlog2.pop %v1265
      %v1267 = vmul.f32 %v1266, 0.6931472
      %v1268 = vmul.f32 -0.5, %v1118
      %v1269 = vadd.f32 %v1268, 1.0
      %v1270 = vmul.f32 %v1269, %v1118
      %v1271 = vand.u32 2147483647, %v1118
      %vm1272 = vcmp.lt.f32.partialorder %v1271, 0.0004427343
      %v1273 = vsel %vm1272, %v1270, %v1267
      %v1274 = vadd.f32 %v1120, 1.0
      %v1275 = vlog2.pop %v1274
      %v1276 = vmul.f32 %v1275, 0.6931472
      %v1277 = vmul.f32 -0.5, %v1120
      %v1278 = vadd.f32 %v1277, 1.0
      %v1279 = vmul.f32 %v1278, %v1120
      %v1280 = vand.u32 2147483647, %v1120
      %vm1281 = vcmp.lt.f32.partialorder %v1280, 0.0004427343
      %v1282 = vsel %vm1281, %v1279, %v1276
      %v1283 = vadd.f32 %v1122, 1.0
      %v1284 = vlog2.pop %v1283
      %v1285 = vmul.f32 %v1284, 0.6931472
      %v1286 = vmul.f32 -0.5, %v1122
      %v1287 = vadd.f32 %v1286, 1.0
      %v1288 = vmul.f32 %v1287, %v1122
      %v1289 = vand.u32 2147483647, %v1122
      %vm1290 = vcmp.lt.f32.partialorder %v1289, 0.0004427343
      %v1291 = vsel %vm1290, %v1288, %v1285
      %v1292 = vadd.f32 %v1124, 1.0
      %v1293 = vlog2.pop %v1292
      %v1294 = vmul.f32 %v1293, 0.6931472
      %v1295 = vmul.f32 -0.5, %v1124
      %v1296 = vadd.f32 %v1295, 1.0
      %v1297 = vmul.f32 %v1296, %v1124
      %v1298 = vand.u32 2147483647, %v1124
      %vm1299 = vcmp.lt.f32.partialorder %v1298, 0.0004427343
      %v1300 = vsel %vm1299, %v1297, %v1294
      %v1301 = vadd.f32 %v1126, 1.0
      %v1302 = vlog2.pop %v1301
      %v1303 = vmul.f32 %v1302, 0.6931472
      %v1304 = vmul.f32 -0.5, %v1126
      %v1305 = vadd.f32 %v1304, 1.0
      %v1306 = vmul.f32 %v1305, %v1126
      %v1307 = vand.u32 2147483647, %v1126
      %vm1308 = vcmp.lt.f32.partialorder %v1307, 0.0004427343
      %v1309 = vsel %vm1308, %v1306, %v1303
      %v1310 = vadd.f32 %v1128, 1.0
      %v1311 = vlog2.pop %v1310
      %v1312 = vmul.f32 %v1311, 0.6931472
      %v1313 = vmul.f32 -0.5, %v1128
      %v1314 = vadd.f32 %v1313, 1.0
      %v1315 = vmul.f32 %v1314, %v1128
      %v1316 = vand.u32 2147483647, %v1128
      %vm1317 = vcmp.lt.f32.partialorder %v1316, 0.0004427343
      %v1318 = vsel %vm1317, %v1315, %v1312
      %v1319 = vadd.f32 %v1130, 1.0
      %v1320 = vlog2.pop %v1319
      %v1321 = vmul.f32 %v1320, 0.6931472
      %v1322 = vmul.f32 -0.5, %v1130
      %v1323 = vadd.f32 %v1322, 1.0
      %v1324 = vmul.f32 %v1323, %v1130
      %v1325 = vand.u32 2147483647, %v1130
      %vm1326 = vcmp.lt.f32.partialorder %v1325, 0.0004427343
      %v1327 = vsel %vm1326, %v1324, %v1321
      %v1328 = vadd.f32 %v1132, 1.0
      %v1329 = vlog2.pop %v1328
      %v1330 = vmul.f32 %v1329, 0.6931472
      %v1331 = vmul.f32 -0.5, %v1132
      %v1332 = vadd.f32 %v1331, 1.0
      %v1333 = vmul.f32 %v1332, %v1132
      %v1334 = vand.u32 2147483647, %v1132
      %vm1335 = vcmp.lt.f32.partialorder %v1334, 0.0004427343
      %v1336 = vsel %vm1335, %v1333, %v1330
      %v1337 = vadd.f32 %v1134, 1.0
      %v1338 = vlog2.pop %v1337
      %v1339 = vmul.f32 %v1338, 0.6931472
      %v1340 = vmul.f32 -0.5, %v1134
      %v1341 = vadd.f32 %v1340, 1.0
      %v1342 = vmul.f32 %v1341, %v1134
      %v1343 = vand.u32 2147483647, %v1134
      %vm1344 = vcmp.lt.f32.partialorder %v1343, 0.0004427343
      %v1345 = vsel %vm1344, %v1342, %v1339
      %v1346 = vadd.f32 %v1136, 1.0
      %v1347 = vlog2.pop %v1346
      %v1348 = vmul.f32 %v1347, 0.6931472
      %v1349 = vmul.f32 -0.5, %v1136
      %v1350 = vadd.f32 %v1349, 1.0
      %v1351 = vmul.f32 %v1350, %v1136
      %v1352 = vand.u32 2147483647, %v1136
      %vm1353 = vcmp.lt.f32.partialorder %v1352, 0.0004427343
      %v1354 = vsel %vm1353, %v1351, %v1348
      %v1355 = vadd.f32 %v1138, 1.0
      %v1356 = vlog2.pop %v1355
      %v1357 = vmul.f32 %v1356, 0.6931472
      %v1358 = vmul.f32 -0.5, %v1138
      %v1359 = vadd.f32 %v1358, 1.0
      %v1360 = vmul.f32 %v1359, %v1138
      %v1361 = vand.u32 2147483647, %v1138
      %vm1362 = vcmp.lt.f32.partialorder %v1361, 0.0004427343
      %v1363 = vsel %vm1362, %v1360, %v1357
      %v1364 = vadd.f32 %v1140, 1.0
      %v1365 = vlog2.pop %v1364
      %v1366 = vmul.f32 %v1365, 0.6931472
      %v1367 = vmul.f32 -0.5, %v1140
      %v1368 = vadd.f32 %v1367, 1.0
      %v1369 = vmul.f32 %v1368, %v1140
      %v1370 = vand.u32 2147483647, %v1140
      %vm1371 = vcmp.lt.f32.partialorder %v1370, 0.0004427343
      %v1372 = vsel %vm1371, %v1369, %v1366
      %v1373 = vadd.f32 %v1142, 1.0
      %v1374 = vlog2.pop %v1373
      %v1375 = vmul.f32 %v1374, 0.6931472
      %v1376 = vmul.f32 -0.5, %v1142
      %v1377 = vadd.f32 %v1376, 1.0
      %v1378 = vmul.f32 %v1377, %v1142
      %v1379 = vand.u32 2147483647, %v1142
      %vm1380 = vcmp.lt.f32.partialorder %v1379, 0.0004427343
      %v1381 = vsel %vm1380, %v1378, %v1375
      %v1382 = vadd.f32 %v1144, 1.0
      %v1383 = vlog2.pop %v1382
      %v1384 = vmul.f32 %v1383, 0.6931472
      %v1385 = vmul.f32 -0.5, %v1144
      %v1386 = vadd.f32 %v1385, 1.0
      %v1387 = vmul.f32 %v1386, %v1144
      %v1388 = vand.u32 2147483647, %v1144
      %vm1389 = vcmp.lt.f32.partialorder %v1388, 0.0004427343
      %v1390 = vsel %vm1389, %v1387, %v1384
      %v1391 = vadd.f32 %v1146, 1.0
      %v1392 = vlog2.pop %v1391
      %v1393 = vmul.f32 %v1392, 0.6931472
      %v1394 = vmul.f32 -0.5, %v1146
      %v1395 = vadd.f32 %v1394, 1.0
      %v1396 = vmul.f32 %v1395, %v1146
      %v1397 = vand.u32 2147483647, %v1146
      %vm1398 = vcmp.lt.f32.partialorder %v1397, 0.0004427343
      %v1399 = vsel %vm1398, %v1396, %v1393
      %v1400 = vadd.f32 %v1148, 1.0
      %v1401 = vlog2.pop %v1400
      %v1402 = vmul.f32 %v1401, 0.6931472
      %v1403 = vmul.f32 -0.5, %v1148
      %v1404 = vadd.f32 %v1403, 1.0
      %v1405 = vmul.f32 %v1404, %v1148
      %v1406 = vand.u32 2147483647, %v1148
      %vm1407 = vcmp.lt.f32.partialorder %v1406, 0.0004427343
      %v1408 = vsel %vm1407, %v1405, %v1402
      %v1409 = vadd.f32 %v1150, 1.0
      %v1410 = vlog2.pop %v1409
      %v1411 = vmul.f32 %v1410, 0.6931472
      %v1412 = vmul.f32 -0.5, %v1150
      %v1413 = vadd.f32 %v1412, 1.0
      %v1414 = vmul.f32 %v1413, %v1150
      %v1415 = vand.u32 2147483647, %v1150
      %vm1416 = vcmp.lt.f32.partialorder %v1415, 0.0004427343
      %v1417 = vsel %vm1416, %v1414, %v1411
      %v1418 = vadd.f32 %v1152, 1.0
      %v1419 = vlog2.pop %v1418
      %v1420 = vmul.f32 %v1419, 0.6931472
      %v1421 = vmul.f32 -0.5, %v1152
      %v1422 = vadd.f32 %v1421, 1.0
      %v1423 = vmul.f32 %v1422, %v1152
      %v1424 = vand.u32 2147483647, %v1152
      %vm1425 = vcmp.lt.f32.partialorder %v1424, 0.0004427343
      %v1426 = vsel %vm1425, %v1423, %v1420
      %v1427 = vadd.f32 %v1154, 1.0
      %v1428 = vlog2.pop %v1427
      %v1429 = vmul.f32 %v1428, 0.6931472
      %v1430 = vmul.f32 -0.5, %v1154
      %v1431 = vadd.f32 %v1430, 1.0
      %v1432 = vmul.f32 %v1431, %v1154
      %v1433 = vand.u32 2147483647, %v1154
      %vm1434 = vcmp.lt.f32.partialorder %v1433, 0.0004427343
      %v1435 = vsel %vm1434, %v1432, %v1429
      %v1436 = vadd.f32 %v1156, 1.0
      %v1437 = vlog2.pop %v1436
      %v1438 = vmul.f32 %v1437, 0.6931472
      %v1439 = vmul.f32 -0.5, %v1156
      %v1440 = vadd.f32 %v1439, 1.0
      %v1441 = vmul.f32 %v1440, %v1156
      %v1442 = vand.u32 2147483647, %v1156
      %vm1443 = vcmp.lt.f32.partialorder %v1442, 0.0004427343
      %v1444 = vsel %vm1443, %v1441, %v1438
      %v1445 = vadd.f32 %v997, %v1165
      %v1446 = vadd.f32 %v998, %v1174
      %v1447 = vadd.f32 %v999, %v1183
      %v1448 = vadd.f32 %v1000, %v1192
      %v1449 = vadd.f32 %v1001, %v1201
      %v1450 = vadd.f32 %v1002, %v1210
      %v1451 = vadd.f32 %v1003, %v1219
      %v1452 = vadd.f32 %v1004, %v1228
      %v1453 = vadd.f32 %v1005, %v1237
      %v1454 = vadd.f32 %v1006, %v1246
      %v1455 = vadd.f32 %v1007, %v1255
      %v1456 = vadd.f32 %v1008, %v1264
      %v1457 = vadd.f32 %v1009, %v1273
      %v1458 = vadd.f32 %v1010, %v1282
      %v1459 = vadd.f32 %v1011, %v1291
      %v1460 = vadd.f32 %v1012, %v1300
      %v1461 = vadd.f32 %v1013, %v1309
      %v1462 = vadd.f32 %v1014, %v1318
      %v1463 = vadd.f32 %v1015, %v1327
      %v1464 = vadd.f32 %v1016, %v1336
      %v1465 = vadd.f32 %v1017, %v1345
      %v1466 = vadd.f32 %v1018, %v1354
      %v1467 = vadd.f32 %v1019, %v1363
      %v1468 = vadd.f32 %v1020, %v1372
      %v1469 = vadd.f32 %v1021, %v1381
      %v1470 = vadd.f32 %v1022, %v1390
      %v1471 = vadd.f32 %v1023, %v1399
      %v1472 = vadd.f32 %v1024, %v1408
      %v1473 = vadd.f32 %v1025, %v1417
      %v1474 = vadd.f32 %v1026, %v1426
      %v1475 = vadd.f32 %v1027, %v1435
      %v1476 = vadd.f32 %v1028, %v1444
      %v1477 = vsub.f32 %v1445, 0.6931472
      %v1478 = vsub.f32 %v1446, 0.6931472
      %v1479 = vsub.f32 %v1447, 0.6931472
      %v1480 = vsub.f32 %v1448, 0.6931472
      %v1481 = vsub.f32 %v1449, 0.6931472
      %v1482 = vsub.f32 %v1450, 0.6931472
      %v1483 = vsub.f32 %v1451, 0.6931472
      %v1484 = vsub.f32 %v1452, 0.6931472
      %v1485 = vsub.f32 %v1453, 0.6931472
      %v1486 = vsub.f32 %v1454, 0.6931472
      %v1487 = vsub.f32 %v1455, 0.6931472
      %v1488 = vsub.f32 %v1456, 0.6931472
      %v1489 = vsub.f32 %v1457, 0.6931472
      %v1490 = vsub.f32 %v1458, 0.6931472
      %v1491 = vsub.f32 %v1459, 0.6931472
      %v1492 = vsub.f32 %v1460, 0.6931472
      %v1493 = vsub.f32 %v1461, 0.6931472
      %v1494 = vsub.f32 %v1462, 0.6931472
      %v1495 = vsub.f32 %v1463, 0.6931472
      %v1496 = vsub.f32 %v1464, 0.6931472
      %v1497 = vsub.f32 %v1465, 0.6931472
      %v1498 = vsub.f32 %v1466, 0.6931472
      %v1499 = vsub.f32 %v1467, 0.6931472
      %v1500 = vsub.f32 %v1468, 0.6931472
      %v1501 = vsub.f32 %v1469, 0.6931472
      %v1502 = vsub.f32 %v1470, 0.6931472
      %v1503 = vsub.f32 %v1471, 0.6931472
      %v1504 = vsub.f32 %v1472, 0.6931472
      %v1505 = vsub.f32 %v1473, 0.6931472
      %v1506 = vsub.f32 %v1474, 0.6931472
      %v1507 = vsub.f32 %v1475, 0.6931472
      %v1508 = vsub.f32 %v1476, 0.6931472
      %v1509 = vpack.c.bf16 %v1478, %v1477
      %v1510 = vpack.c.bf16 %v1480, %v1479
      %v1511 = vpack.c.bf16 %v1482, %v1481
      %v1512 = vpack.c.bf16 %v1484, %v1483
      %v1513 = vpack.c.bf16 %v1486, %v1485
      %v1514 = vpack.c.bf16 %v1488, %v1487
      %v1515 = vpack.c.bf16 %v1490, %v1489
      %v1516 = vpack.c.bf16 %v1492, %v1491
      %v1517 = vpack.c.bf16 %v1494, %v1493
      %v1518 = vpack.c.bf16 %v1496, %v1495
      %v1519 = vpack.c.bf16 %v1498, %v1497
      %v1520 = vpack.c.bf16 %v1500, %v1499
      %v1521 = vpack.c.bf16 %v1502, %v1501
      %v1522 = vpack.c.bf16 %v1504, %v1503
      %v1523 = vpack.c.bf16 %v1506, %v1505
      %v1524 = vpack.c.bf16 %v1508, %v1507
      %v1525 = vld [vmem:[%s6] sm:$0xf]
      %v1526 = vld [vmem:[%s6 + $0x4] sm:$0xf]
      %v1527 = vld [vmem:[%s6 + $0x8] sm:$0xf]
      %v1528 = vld [vmem:[%s6 + $0xc] sm:$0xf]
      %v1529 = vld [vmem:[%s6 + $0x10] sm:$0xf]
      %v1530 = vld [vmem:[%s6 + $0x14] sm:$0xf]
      %v1531 = vld [vmem:[%s6 + $0x18] sm:$0xf]
      %v1532 = vld [vmem:[%s6 + $0x1c] sm:$0xf]
      %v1533 = vld [vmem:[%s7] sm:$0x1]
      %v1535 = vlaneseq
      %v1536 = vshrl.u32 %v1535, 7
      %v1537 = vsub.s32 0, %v1536
      %v1538 = vrot.slane %v1533, %v1537
      %v1548 = vunpack.c.l.b16 %v1525
      %v1549 = vunpack.c.l.b16 %v1526
      %v1550 = vunpack.c.l.b16 %v1527
      %v1551 = vunpack.c.l.b16 %v1528
      %v1552 = vunpack.c.l.b16 %v1529
      %v1553 = vunpack.c.l.b16 %v1530
      %v1554 = vunpack.c.l.b16 %v1531
      %v1555 = vunpack.c.l.b16 %v1532
      %v1556 = vpack.c.b16 %v1549, %v1548
      %v1557 = vpack.c.b16 %v1551, %v1550
      %v1558 = vpack.c.b16 %v1553, %v1552
      %v1559 = vpack.c.b16 %v1555, %v1554
      %vm1564 = vcmask 523264
      %v1566 = vsel %vm1564, %v1509, 0
      %v1569 = vsel %vm1564, %v1510, 0
      %v1572 = vsel %vm1564, %v1511, 0
      %v1575 = vsel %vm1564, %v1512, 0
      %v1578 = vsel %vm1564, %v1513, 0
      %v1581 = vsel %vm1564, %v1514, 0
      %v1584 = vsel %vm1564, %v1515, 0
      %v1587 = vsel %vm1564, %v1516, 0
      %v1590 = vsel %vm1564, %v1517, 0
      %v1593 = vsel %vm1564, %v1518, 0
      %v1596 = vsel %vm1564, %v1519, 0
      %v1599 = vsel %vm1564, %v1520, 0
      %v1602 = vsel %vm1564, %v1521, 0
      %v1605 = vsel %vm1564, %v1522, 0
      %v1608 = vsel %vm1564, %v1523, 0
      %v1611 = vsel %vm1564, %v1524, 0
      %1613 = vmatprep.subr.bf16.mxu0 0
      %1614 = vmatpush1.bf16.msra.mxu0 %v1556
      %1615 = vmatprep.subr.bf16.mxu0 0
      %1616 = vmatpush1.bf16.msra.mxu0 %v1557
      %1617 = vmatprep.subr.bf16.mxu0 0
      %1618 = vmatpush1.bf16.msra.mxu0 %v1558
      %1619 = vmatprep.subr.bf16.mxu0 0
      %1620 = vmatpush1.bf16.msra.mxu0 %v1559
      %1621 = vmatprep.subr.bf16.mxu0 0
      %1622 = vmatpush1.bf16.msra.mxu0 0
      %1623 = vmatprep.subr.bf16.mxu0 0
      %1624 = vmatpush1.bf16.msra.mxu0 0
      %1625 = vmatprep.subr.bf16.mxu0 0
      %1626 = vmatpush1.bf16.msra.mxu0 0
      %1627 = vmatprep.subr.bf16.mxu0 0
      %1628 = vmatpush1.bf16.msra.mxu0 0
      %1629 = vmatprep.subr.bf16.mxu0 0
      %1630 = vmatpush1.bf16.msra.mxu0 0
      %1631 = vmatprep.subr.bf16.mxu0 0
      %1632 = vmatpush1.bf16.msra.mxu0 0
      %1633 = vmatprep.subr.bf16.mxu0 0
      %1634 = vmatpush1.bf16.msra.mxu0 0
      %1635 = vmatprep.subr.bf16.mxu0 0
      %1636 = vmatpush1.bf16.msra.mxu0 0
      %1637 = vmatprep.subr.bf16.mxu0 0
      %1638 = vmatpush1.bf16.msra.mxu0 0
      %1639 = vmatprep.subr.bf16.mxu0 0
      %1640 = vmatpush1.bf16.msra.mxu0 0
      %1641 = vmatprep.subr.bf16.mxu0 0
      %1642 = vmatpush1.bf16.msra.mxu0 0
      %1643 = vmatprep.subr.bf16.mxu0 0
      %1644 = vmatpush1.bf16.msra.mxu0 0
      %1645 = vmatprep.mubr.bf16.mxu0 0
      %1646 = vmatmul.mubr.bf16.gmra.mrb[0].mxu0 %v1566
      %v1647 = vpop.f32.mrb[0].mxu0
      %v1648 = vadd.f32 %v1538, %v1647
      %v1649 = vpop.f32.mrb[0].mxu0
      %v1650 = vpop.f32.mrb[0].mxu0
      %v1651 = vadd.f32 %v1538, %v1650
      %v1652 = vpop.f32.mrb[0].mxu0
      %1653 = vmatprep.mubr.bf16.mxu0 0
      %1654 = vmatmul.mubr.bf16.gmra.mrb[0].mxu0 %v1569
      %v1655 = vpop.f32.mrb[0].mxu0
      %v1656 = vadd.f32 %v1538, %v1655
      %v1657 = vpop.f32.mrb[0].mxu0
      %v1658 = vpop.f32.mrb[0].mxu0
      %v1659 = vadd.f32 %v1538, %v1658
      %v1660 = vpop.f32.mrb[0].mxu0
      %1661 = vmatprep.mubr.bf16.mxu0 0
      %1662 = vmatmul.mubr.bf16.gmra.mrb[0].mxu0 %v1572
      %v1663 = vpop.f32.mrb[0].mxu0
      %v1664 = vadd.f32 %v1538, %v1663
      %v1665 = vpop.f32.mrb[0].mxu0
      %v1666 = vpop.f32.mrb[0].mxu0
      %v1667 = vadd.f32 %v1538, %v1666
      %v1668 = vpop.f32.mrb[0].mxu0
      %1669 = vmatprep.mubr.bf16.mxu0 0
      %1670 = vmatmul.mubr.bf16.gmra.mrb[0].mxu0 %v1575
      %v1671 = vpop.f32.mrb[0].mxu0
      %v1672 = vadd.f32 %v1538, %v1671
      %v1673 = vpop.f32.mrb[0].mxu0
      %v1674 = vpop.f32.mrb[0].mxu0
      %v1675 = vadd.f32 %v1538, %v1674
      %v1676 = vpop.f32.mrb[0].mxu0
      %1677 = vmatprep.mubr.bf16.mxu0 0
      %1678 = vmatmul.mubr.bf16.gmra.mrb[0].mxu0 %v1578
      %v1679 = vpop.f32.mrb[0].mxu0
      %v1680 = vadd.f32 %v1538, %v1679
      %v1681 = vpop.f32.mrb[0].mxu0
      %v1682 = vpop.f32.mrb[0].mxu0
      %v1683 = vadd.f32 %v1538, %v1682
      %v1684 = vpop.f32.mrb[0].mxu0
      %1685 = vmatprep.mubr.bf16.mxu0 0
      %1686 = vmatmul.mubr.bf16.gmra.mrb[0].mxu0 %v1581
      %v1687 = vpop.f32.mrb[0].mxu0
      %v1688 = vadd.f32 %v1538, %v1687
      %v1689 = vpop.f32.mrb[0].mxu0
      %v1690 = vpop.f32.mrb[0].mxu0
      %v1691 = vadd.f32 %v1538, %v1690
      %v1692 = vpop.f32.mrb[0].mxu0
      %1693 = vmatprep.mubr.bf16.mxu0 0
      %1694 = vmatmul.mubr.bf16.gmra.mrb[0].mxu0 %v1584
      %v1695 = vpop.f32.mrb[0].mxu0
      %v1696 = vadd.f32 %v1538, %v1695
      %v1697 = vpop.f32.mrb[0].mxu0
      %v1698 = vpop.f32.mrb[0].mxu0
      %v1699 = vadd.f32 %v1538, %v1698
      %v1700 = vpop.f32.mrb[0].mxu0
      %1701 = vmatprep.mubr.bf16.mxu0 0
      %1702 = vmatmul.mubr.bf16.gmra.mrb[0].mxu0 %v1587
      %v1703 = vpop.f32.mrb[0].mxu0
      %v1704 = vadd.f32 %v1538, %v1703
      %v1705 = vpop.f32.mrb[0].mxu0
      %v1706 = vpop.f32.mrb[0].mxu0
      %v1707 = vadd.f32 %v1538, %v1706
      %v1708 = vpop.f32.mrb[0].mxu0
      %1709 = vmatprep.mubr.bf16.mxu0 0
      %1710 = vmatmul.mubr.bf16.gmra.mrb[0].mxu0 %v1590
      %v1711 = vpop.f32.mrb[0].mxu0
      %v1712 = vadd.f32 %v1538, %v1711
      %v1713 = vpop.f32.mrb[0].mxu0
      %v1714 = vpop.f32.mrb[0].mxu0
      %v1715 = vadd.f32 %v1538, %v1714
      %v1716 = vpop.f32.mrb[0].mxu0
      %1717 = vmatprep.mubr.bf16.mxu0 0
      %1718 = vmatmul.mubr.bf16.gmra.mrb[0].mxu0 %v1593
      %v1719 = vpop.f32.mrb[0].mxu0
      %v1720 = vadd.f32 %v1538, %v1719
      %v1721 = vpop.f32.mrb[0].mxu0
      %v1722 = vpop.f32.mrb[0].mxu0
      %v1723 = vadd.f32 %v1538, %v1722
      %v1724 = vpop.f32.mrb[0].mxu0
      %1725 = vmatprep.mubr.bf16.mxu0 0
      %1726 = vmatmul.mubr.bf16.gmra.mrb[0].mxu0 %v1596
      %v1727 = vpop.f32.mrb[0].mxu0
      %v1728 = vadd.f32 %v1538, %v1727
      %v1729 = vpop.f32.mrb[0].mxu0
      %v1730 = vpop.f32.mrb[0].mxu0
      %v1731 = vadd.f32 %v1538, %v1730
      %v1732 = vpop.f32.mrb[0].mxu0
      %1733 = vmatprep.mubr.bf16.mxu0 0
      %1734 = vmatmul.mubr.bf16.gmra.mrb[0].mxu0 %v1599
      %v1735 = vpop.f32.mrb[0].mxu0
      %v1736 = vadd.f32 %v1538, %v1735
      %v1737 = vpop.f32.mrb[0].mxu0
      %v1738 = vpop.f32.mrb[0].mxu0
      %v1739 = vadd.f32 %v1538, %v1738
      %v1740 = vpop.f32.mrb[0].mxu0
      %1741 = vmatprep.mubr.bf16.mxu0 0
      %1742 = vmatmul.mubr.bf16.gmra.mrb[0].mxu0 %v1602
      %v1743 = vpop.f32.mrb[0].mxu0
      %v1744 = vadd.f32 %v1538, %v1743
      %v1745 = vpop.f32.mrb[0].mxu0
      %v1746 = vpop.f32.mrb[0].mxu0
      %v1747 = vadd.f32 %v1538, %v1746
      %v1748 = vpop.f32.mrb[0].mxu0
      %1749 = vmatprep.mubr.bf16.mxu0 0
      %1750 = vmatmul.mubr.bf16.gmra.mrb[0].mxu0 %v1605
      %v1751 = vpop.f32.mrb[0].mxu0
      %v1752 = vadd.f32 %v1538, %v1751
      %v1753 = vpop.f32.mrb[0].mxu0
      %v1754 = vpop.f32.mrb[0].mxu0
      %v1755 = vadd.f32 %v1538, %v1754
      %v1756 = vpop.f32.mrb[0].mxu0
      %1757 = vmatprep.mubr.bf16.mxu0 0
      %1758 = vmatmul.mubr.bf16.gmra.mrb[0].mxu0 %v1608
      %v1759 = vpop.f32.mrb[0].mxu0
      %v1760 = vadd.f32 %v1538, %v1759
      %v1761 = vpop.f32.mrb[0].mxu0
      %v1762 = vpop.f32.mrb[0].mxu0
      %v1763 = vadd.f32 %v1538, %v1762
      %v1764 = vpop.f32.mrb[0].mxu0
      %1765 = vmatprep.mubr.bf16.mxu0 0
      %1766 = vmatmul.mubr.bf16.gmra.mrb[0].mxu0 %v1611
      %v1767 = vpop.f32.mrb[0].mxu0
      %v1768 = vadd.f32 %v1538, %v1767
      %v1769 = vpop.f32.mrb[0].mxu0
      %v1770 = vpop.f32.mrb[0].mxu0
      %v1771 = vadd.f32 %v1538, %v1770
      %v1772 = vpop.f32.mrb[0].mxu0
      %1773 = vdwg.mxu0
      %v1774 = vld [vmem:[%s345] sm:$0xff]
      %v1775 = vld [vmem:[%s345 + $0x8] sm:$0xff]
      %v1776 = vld [vmem:[%s345 + $0x10] sm:$0xff]
      %v1777 = vld [vmem:[%s345 + $0x18] sm:$0xff]
      %v1778 = vld [vmem:[%s345 + $0x20] sm:$0xff]
      %v1779 = vld [vmem:[%s345 + $0x28] sm:$0xff]
      %v1780 = vld [vmem:[%s345 + $0x30] sm:$0xff]
      %v1781 = vld [vmem:[%s345 + $0x38] sm:$0xff]
      %v1782 = vld [vmem:[%s345 + $0x40] sm:$0xff]
      %v1783 = vld [vmem:[%s345 + $0x48] sm:$0xff]
      %v1784 = vld [vmem:[%s345 + $0x50] sm:$0xff]
      %v1785 = vld [vmem:[%s345 + $0x58] sm:$0xff]
      %v1786 = vld [vmem:[%s345 + $0x60] sm:$0xff]
      %v1787 = vld [vmem:[%s345 + $0x68] sm:$0xff]
      %v1788 = vld [vmem:[%s345 + $0x70] sm:$0xff]
      %v1789 = vld [vmem:[%s345 + $0x78] sm:$0xff]
      %v1790 = vld [vmem:[%s345 + $0x80] sm:$0xff]
      %v1791 = vld [vmem:[%s345 + $0x88] sm:$0xff]
      %v1792 = vld [vmem:[%s345 + $0x90] sm:$0xff]
      %v1793 = vld [vmem:[%s345 + $0x98] sm:$0xff]
      %v1794 = vld [vmem:[%s345 + $0xa0] sm:$0xff]
      %v1795 = vld [vmem:[%s345 + $0xa8] sm:$0xff]
      %v1796 = vld [vmem:[%s345 + $0xb0] sm:$0xff]
      %v1797 = vld [vmem:[%s345 + $0xb8] sm:$0xff]
      %v1798 = vld [vmem:[%s345 + $0xc0] sm:$0xff]
      %v1799 = vld [vmem:[%s345 + $0xc8] sm:$0xff]
      %v1800 = vld [vmem:[%s345 + $0xd0] sm:$0xff]
      %v1801 = vld [vmem:[%s345 + $0xd8] sm:$0xff]
      %v1802 = vld [vmem:[%s345 + $0xe0] sm:$0xff]
      %v1803 = vld [vmem:[%s345 + $0xe8] sm:$0xff]
      %v1804 = vld [vmem:[%s345 + $0xf0] sm:$0xff]
      %v1805 = vld [vmem:[%s345 + $0xf8] sm:$0xff]
      %v1806 = vsub.f32 %v1774, 3.5
      %v1807 = vsub.f32 %v1775, 3.5
      %v1808 = vsub.f32 %v1776, 3.5
      %v1809 = vsub.f32 %v1777, 3.5
      %v1810 = vsub.f32 %v1778, 3.5
      %v1811 = vsub.f32 %v1779, 3.5
      %v1812 = vsub.f32 %v1780, 3.5
      %v1813 = vsub.f32 %v1781, 3.5
      %v1814 = vsub.f32 %v1782, 3.5
      %v1815 = vsub.f32 %v1783, 3.5
      %v1816 = vsub.f32 %v1784, 3.5
      %v1817 = vsub.f32 %v1785, 3.5
      %v1818 = vsub.f32 %v1786, 3.5
      %v1819 = vsub.f32 %v1787, 3.5
      %v1820 = vsub.f32 %v1788, 3.5
      %v1821 = vsub.f32 %v1789, 3.5
      %v1822 = vsub.f32 %v1790, 3.5
      %v1823 = vsub.f32 %v1791, 3.5
      %v1824 = vsub.f32 %v1792, 3.5
      %v1825 = vsub.f32 %v1793, 3.5
      %v1826 = vsub.f32 %v1794, 3.5
      %v1827 = vsub.f32 %v1795, 3.5
      %v1828 = vsub.f32 %v1796, 3.5
      %v1829 = vsub.f32 %v1797, 3.5
      %v1830 = vsub.f32 %v1798, 3.5
      %v1831 = vsub.f32 %v1799, 3.5
      %v1832 = vsub.f32 %v1800, 3.5
      %v1833 = vsub.f32 %v1801, 3.5
      %v1834 = vsub.f32 %v1802, 3.5
      %v1835 = vsub.f32 %v1803, 3.5
      %v1836 = vsub.f32 %v1804, 3.5
      %v1837 = vsub.f32 %v1805, 3.5
      %v1838 = vmul.f32 %v1806, 5.0
      %v1839 = vmul.f32 %v1807, 5.0
      %v1840 = vmul.f32 %v1808, 5.0
      %v1841 = vmul.f32 %v1809, 5.0
      %v1842 = vmul.f32 %v1810, 5.0
      %v1843 = vmul.f32 %v1811, 5.0
      %v1844 = vmul.f32 %v1812, 5.0
      %v1845 = vmul.f32 %v1813, 5.0
      %v1846 = vmul.f32 %v1814, 5.0
      %v1847 = vmul.f32 %v1815, 5.0
      %v1848 = vmul.f32 %v1816, 5.0
      %v1849 = vmul.f32 %v1817, 5.0
      %v1850 = vmul.f32 %v1818, 5.0
      %v1851 = vmul.f32 %v1819, 5.0
      %v1852 = vmul.f32 %v1820, 5.0
      %v1853 = vmul.f32 %v1821, 5.0
      %v1854 = vmul.f32 %v1822, 5.0
      %v1855 = vmul.f32 %v1823, 5.0
      %v1856 = vmul.f32 %v1824, 5.0
      %v1857 = vmul.f32 %v1825, 5.0
      %v1858 = vmul.f32 %v1826, 5.0
      %v1859 = vmul.f32 %v1827, 5.0
      %v1860 = vmul.f32 %v1828, 5.0
      %v1861 = vmul.f32 %v1829, 5.0
      %v1862 = vmul.f32 %v1830, 5.0
      %v1863 = vmul.f32 %v1831, 5.0
      %v1864 = vmul.f32 %v1832, 5.0
      %v1865 = vmul.f32 %v1833, 5.0
      %v1866 = vmul.f32 %v1834, 5.0
      %v1867 = vmul.f32 %v1835, 5.0
      %v1868 = vmul.f32 %v1836, 5.0
      %v1869 = vmul.f32 %v1837, 5.0
      %v1870 = vxor.u32 %v1838, 2147483648
      %v1871 = vxor.u32 %v1839, 2147483648
      %v1872 = vxor.u32 %v1840, 2147483648
      %v1873 = vxor.u32 %v1841, 2147483648
      %v1874 = vxor.u32 %v1842, 2147483648
      %v1875 = vxor.u32 %v1843, 2147483648
      %v1876 = vxor.u32 %v1844, 2147483648
      %v1877 = vxor.u32 %v1845, 2147483648
      %v1878 = vxor.u32 %v1846, 2147483648
      %v1879 = vxor.u32 %v1847, 2147483648
      %v1880 = vxor.u32 %v1848, 2147483648
      %v1881 = vxor.u32 %v1849, 2147483648
      %v1882 = vxor.u32 %v1850, 2147483648
      %v1883 = vxor.u32 %v1851, 2147483648
      %v1884 = vxor.u32 %v1852, 2147483648
      %v1885 = vxor.u32 %v1853, 2147483648
      %v1886 = vxor.u32 %v1854, 2147483648
      %v1887 = vxor.u32 %v1855, 2147483648
      %v1888 = vxor.u32 %v1856, 2147483648
      %v1889 = vxor.u32 %v1857, 2147483648
      %v1890 = vxor.u32 %v1858, 2147483648
      %v1891 = vxor.u32 %v1859, 2147483648
      %v1892 = vxor.u32 %v1860, 2147483648
      %v1893 = vxor.u32 %v1861, 2147483648
      %v1894 = vxor.u32 %v1862, 2147483648
      %v1895 = vxor.u32 %v1863, 2147483648
      %v1896 = vxor.u32 %v1864, 2147483648
      %v1897 = vxor.u32 %v1865, 2147483648
      %v1898 = vxor.u32 %v1866, 2147483648
      %v1899 = vxor.u32 %v1867, 2147483648
      %v1900 = vxor.u32 %v1868, 2147483648
      %v1901 = vxor.u32 %v1869, 2147483648
      %v1902 = vmul.f32 %v1870, 1.442695
      %v1903 = vpow.pop %v1902
      %v1904 = vmul.f32 %v1871, 1.442695
      %v1905 = vpow.pop %v1904
      %v1906 = vmul.f32 %v1872, 1.442695
      %v1907 = vpow.pop %v1906
      %v1908 = vmul.f32 %v1873, 1.442695
      %v1909 = vpow.pop %v1908
      %v1910 = vmul.f32 %v1874, 1.442695
      %v1911 = vpow.pop %v1910
      %v1912 = vmul.f32 %v1875, 1.442695
      %v1913 = vpow.pop %v1912
      %v1914 = vmul.f32 %v1876, 1.442695
      %v1915 = vpow.pop %v1914
      %v1916 = vmul.f32 %v1877, 1.442695
      %v1917 = vpow.pop %v1916
      %v1918 = vmul.f32 %v1878, 1.442695
      %v1919 = vpow.pop %v1918
      %v1920 = vmul.f32 %v1879, 1.442695
      %v1921 = vpow.pop %v1920
      %v1922 = vmul.f32 %v1880, 1.442695
      %v1923 = vpow.pop %v1922
      %v1924 = vmul.f32 %v1881, 1.442695
      %v1925 = vpow.pop %v1924
      %v1926 = vmul.f32 %v1882, 1.442695
      %v1927 = vpow.pop %v1926
      %v1928 = vmul.f32 %v1883, 1.442695
      %v1929 = vpow.pop %v1928
      %v1930 = vmul.f32 %v1884, 1.442695
      %v1931 = vpow.pop %v1930
      %v1932 = vmul.f32 %v1885, 1.442695
      %v1933 = vpow.pop %v1932
      %v1934 = vmul.f32 %v1886, 1.442695
      %v1935 = vpow.pop %v1934
      %v1936 = vmul.f32 %v1887, 1.442695
      %v1937 = vpow.pop %v1936
      %v1938 = vmul.f32 %v1888, 1.442695
      %v1939 = vpow.pop %v1938
      %v1940 = vmul.f32 %v1889, 1.442695
      %v1941 = vpow.pop %v1940
      %v1942 = vmul.f32 %v1890, 1.442695
      %v1943 = vpow.pop %v1942
      %v1944 = vmul.f32 %v1891, 1.442695
      %v1945 = vpow.pop %v1944
      %v1946 = vmul.f32 %v1892, 1.442695
      %v1947 = vpow.pop %v1946
      %v1948 = vmul.f32 %v1893, 1.442695
      %v1949 = vpow.pop %v1948
      %v1950 = vmul.f32 %v1894, 1.442695
      %v1951 = vpow.pop %v1950
      %v1952 = vmul.f32 %v1895, 1.442695
      %v1953 = vpow.pop %v1952
      %v1954 = vmul.f32 %v1896, 1.442695
      %v1955 = vpow.pop %v1954
      %v1956 = vmul.f32 %v1897, 1.442695
      %v1957 = vpow.pop %v1956
      %v1958 = vmul.f32 %v1898, 1.442695
      %v1959 = vpow.pop %v1958
      %v1960 = vmul.f32 %v1899, 1.442695
      %v1961 = vpow.pop %v1960
      %v1962 = vmul.f32 %v1900, 1.442695
      %v1963 = vpow.pop %v1962
      %v1964 = vmul.f32 %v1901, 1.442695
      %v1965 = vpow.pop %v1964
      %v1966 = vadd.f32 %v1903, 1.0
      %v1967 = vadd.f32 %v1905, 1.0
      %v1968 = vadd.f32 %v1907, 1.0
      %v1969 = vadd.f32 %v1909, 1.0
      %v1970 = vadd.f32 %v1911, 1.0
      %v1971 = vadd.f32 %v1913, 1.0
      %v1972 = vadd.f32 %v1915, 1.0
      %v1973 = vadd.f32 %v1917, 1.0
      %v1974 = vadd.f32 %v1919, 1.0
      %v1975 = vadd.f32 %v1921, 1.0
      %v1976 = vadd.f32 %v1923, 1.0
      %v1977 = vadd.f32 %v1925, 1.0
      %v1978 = vadd.f32 %v1927, 1.0
      %v1979 = vadd.f32 %v1929, 1.0
      %v1980 = vadd.f32 %v1931, 1.0
      %v1981 = vadd.f32 %v1933, 1.0
      %v1982 = vadd.f32 %v1935, 1.0
      %v1983 = vadd.f32 %v1937, 1.0
      %v1984 = vadd.f32 %v1939, 1.0
      %v1985 = vadd.f32 %v1941, 1.0
      %v1986 = vadd.f32 %v1943, 1.0
      %v1987 = vadd.f32 %v1945, 1.0
      %v1988 = vadd.f32 %v1947, 1.0
      %v1989 = vadd.f32 %v1949, 1.0
      %v1990 = vadd.f32 %v1951, 1.0
      %v1991 = vadd.f32 %v1953, 1.0
      %v1992 = vadd.f32 %v1955, 1.0
      %v1993 = vadd.f32 %v1957, 1.0
      %v1994 = vadd.f32 %v1959, 1.0
      %v1995 = vadd.f32 %v1961, 1.0
      %v1996 = vadd.f32 %v1963, 1.0
      %v1997 = vadd.f32 %v1965, 1.0
      %v1998 = vrcp.pop %v1966
      %v1999 = vmul.f32 1.0, %v1998
      %v2000 = vrcp.pop %v1967
      %v2001 = vmul.f32 1.0, %v2000
      %v2002 = vrcp.pop %v1968
      %v2003 = vmul.f32 1.0, %v2002
      %v2004 = vrcp.pop %v1969
      %v2005 = vmul.f32 1.0, %v2004
      %v2006 = vrcp.pop %v1970
      %v2007 = vmul.f32 1.0, %v2006
      %v2008 = vrcp.pop %v1971
      %v2009 = vmul.f32 1.0, %v2008
      %v2010 = vrcp.pop %v1972
      %v2011 = vmul.f32 1.0, %v2010
      %v2012 = vrcp.pop %v1973
      %v2013 = vmul.f32 1.0, %v2012
      %v2014 = vrcp.pop %v1974
      %v2015 = vmul.f32 1.0, %v2014
      %v2016 = vrcp.pop %v1975
      %v2017 = vmul.f32 1.0, %v2016
      %v2018 = vrcp.pop %v1976
      %v2019 = vmul.f32 1.0, %v2018
      %v2020 = vrcp.pop %v1977
      %v2021 = vmul.f32 1.0, %v2020
      %v2022 = vrcp.pop %v1978
      %v2023 = vmul.f32 1.0, %v2022
      %v2024 = vrcp.pop %v1979
      %v2025 = vmul.f32 1.0, %v2024
      %v2026 = vrcp.pop %v1980
      %v2027 = vmul.f32 1.0, %v2026
      %v2028 = vrcp.pop %v1981
      %v2029 = vmul.f32 1.0, %v2028
      %v2030 = vrcp.pop %v1982
      %v2031 = vmul.f32 1.0, %v2030
      %v2032 = vrcp.pop %v1983
      %v2033 = vmul.f32 1.0, %v2032
      %v2034 = vrcp.pop %v1984
      %v2035 = vmul.f32 1.0, %v2034
      %v2036 = vrcp.pop %v1985
      %v2037 = vmul.f32 1.0, %v2036
      %v2038 = vrcp.pop %v1986
      %v2039 = vmul.f32 1.0, %v2038
      %v2040 = vrcp.pop %v1987
      %v2041 = vmul.f32 1.0, %v2040
      %v2042 = vrcp.pop %v1988
      %v2043 = vmul.f32 1.0, %v2042
      %v2044 = vrcp.pop %v1989
      %v2045 = vmul.f32 1.0, %v2044
      %v2046 = vrcp.pop %v1990
      %v2047 = vmul.f32 1.0, %v2046
      %v2048 = vrcp.pop %v1991
      %v2049 = vmul.f32 1.0, %v2048
      %v2050 = vrcp.pop %v1992
      %v2051 = vmul.f32 1.0, %v2050
      %v2052 = vrcp.pop %v1993
      %v2053 = vmul.f32 1.0, %v2052
      %v2054 = vrcp.pop %v1994
      %v2055 = vmul.f32 1.0, %v2054
      %v2056 = vrcp.pop %v1995
      %v2057 = vmul.f32 1.0, %v2056
      %v2058 = vrcp.pop %v1996
      %v2059 = vmul.f32 1.0, %v2058
      %v2060 = vrcp.pop %v1997
      %v2061 = vmul.f32 1.0, %v2060
      %v2062 = vsub.f32 1.0, %v1999
      %v2063 = vsub.f32 1.0, %v2001
      %v2064 = vsub.f32 1.0, %v2003
      %v2065 = vsub.f32 1.0, %v2005
      %v2066 = vsub.f32 1.0, %v2007
      %v2067 = vsub.f32 1.0, %v2009
      %v2068 = vsub.f32 1.0, %v2011
      %v2069 = vsub.f32 1.0, %v2013
      %v2070 = vsub.f32 1.0, %v2015
      %v2071 = vsub.f32 1.0, %v2017
      %v2072 = vsub.f32 1.0, %v2019
      %v2073 = vsub.f32 1.0, %v2021
      %v2074 = vsub.f32 1.0, %v2023
      %v2075 = vsub.f32 1.0, %v2025
      %v2076 = vsub.f32 1.0, %v2027
      %v2077 = vsub.f32 1.0, %v2029
      %v2078 = vsub.f32 1.0, %v2031
      %v2079 = vsub.f32 1.0, %v2033
      %v2080 = vsub.f32 1.0, %v2035
      %v2081 = vsub.f32 1.0, %v2037
      %v2082 = vsub.f32 1.0, %v2039
      %v2083 = vsub.f32 1.0, %v2041
      %v2084 = vsub.f32 1.0, %v2043
      %v2085 = vsub.f32 1.0, %v2045
      %v2086 = vsub.f32 1.0, %v2047
      %v2087 = vsub.f32 1.0, %v2049
      %v2088 = vsub.f32 1.0, %v2051
      %v2089 = vsub.f32 1.0, %v2053
      %v2090 = vsub.f32 1.0, %v2055
      %v2091 = vsub.f32 1.0, %v2057
      %v2092 = vsub.f32 1.0, %v2059
      %v2093 = vsub.f32 1.0, %v2061
      %2126 = vrot.lane.b32.xlu0 %v1648, 96
      %v2127 = vpop.permute.xlu0 %2126
      %2128 = vrot.lane.b32.xlu0 %v1651, 96
      %v2129 = vpop.permute.xlu0 %2128
      %2130 = vrot.lane.b32.xlu0 %v1656, 96
      %v2131 = vpop.permute.xlu0 %2130
      %2132 = vrot.lane.b32.xlu0 %v1659, 96
      %v2133 = vpop.permute.xlu0 %2132
      %2134 = vrot.lane.b32.xlu0 %v1664, 96
      %v2135 = vpop.permute.xlu0 %2134
      %2136 = vrot.lane.b32.xlu0 %v1667, 96
      %v2137 = vpop.permute.xlu0 %2136
      %2138 = vrot.lane.b32.xlu0 %v1672, 96
      %v2139 = vpop.permute.xlu0 %2138
      %2140 = vrot.lane.b32.xlu0 %v1675, 96
      %v2141 = vpop.permute.xlu0 %2140
      %2142 = vrot.lane.b32.xlu0 %v1680, 96
      %v2143 = vpop.permute.xlu0 %2142
      %2144 = vrot.lane.b32.xlu0 %v1683, 96
      %v2145 = vpop.permute.xlu0 %2144
      %2146 = vrot.lane.b32.xlu0 %v1688, 96
      %v2147 = vpop.permute.xlu0 %2146
      %2148 = vrot.lane.b32.xlu0 %v1691, 96
      %v2149 = vpop.permute.xlu0 %2148
      %2150 = vrot.lane.b32.xlu0 %v1696, 96
      %v2151 = vpop.permute.xlu0 %2150
      %2152 = vrot.lane.b32.xlu0 %v1699, 96
      %v2153 = vpop.permute.xlu0 %2152
      %2154 = vrot.lane.b32.xlu0 %v1704, 96
      %v2155 = vpop.permute.xlu0 %2154
      %2156 = vrot.lane.b32.xlu0 %v1707, 96
      %v2157 = vpop.permute.xlu0 %2156
      %2158 = vrot.lane.b32.xlu0 %v1712, 96
      %v2159 = vpop.permute.xlu0 %2158
      %2160 = vrot.lane.b32.xlu0 %v1715, 96
      %v2161 = vpop.permute.xlu0 %2160
      %2162 = vrot.lane.b32.xlu0 %v1720, 96
      %v2163 = vpop.permute.xlu0 %2162
      %2164 = vrot.lane.b32.xlu0 %v1723, 96
      %v2165 = vpop.permute.xlu0 %2164
      %2166 = vrot.lane.b32.xlu0 %v1728, 96
      %v2167 = vpop.permute.xlu0 %2166
      %2168 = vrot.lane.b32.xlu0 %v1731, 96
      %v2169 = vpop.permute.xlu0 %2168
      %2170 = vrot.lane.b32.xlu0 %v1736, 96
      %v2171 = vpop.permute.xlu0 %2170
      %2172 = vrot.lane.b32.xlu0 %v1739, 96
      %v2173 = vpop.permute.xlu0 %2172
      %2174 = vrot.lane.b32.xlu0 %v1744, 96
      %v2175 = vpop.permute.xlu0 %2174
      %2176 = vrot.lane.b32.xlu0 %v1747, 96
      %v2177 = vpop.permute.xlu0 %2176
      %2178 = vrot.lane.b32.xlu0 %v1752, 96
      %v2179 = vpop.permute.xlu0 %2178
      %2180 = vrot.lane.b32.xlu0 %v1755, 96
      %v2181 = vpop.permute.xlu0 %2180
      %2182 = vrot.lane.b32.xlu0 %v1760, 96
      %v2183 = vpop.permute.xlu0 %2182
      %2184 = vrot.lane.b32.xlu0 %v1763, 96
      %v2185 = vpop.permute.xlu0 %2184
      %2186 = vrot.lane.b32.xlu0 %v1768, 96
      %v2187 = vpop.permute.xlu0 %2186
      %2188 = vrot.lane.b32.xlu0 %v1771, 96
      %v2189 = vpop.permute.xlu0 %2188
      %v2222 = vmul.f32 %v1648, %v2127
      %v2223 = vmul.f32 %v1651, %v2129
      %v2224 = vmul.f32 %v1656, %v2131
      %v2225 = vmul.f32 %v1659, %v2133
      %v2226 = vmul.f32 %v1664, %v2135
      %v2227 = vmul.f32 %v1667, %v2137
      %v2228 = vmul.f32 %v1672, %v2139
      %v2229 = vmul.f32 %v1675, %v2141
      %v2230 = vmul.f32 %v1680, %v2143
      %v2231 = vmul.f32 %v1683, %v2145
      %v2232 = vmul.f32 %v1688, %v2147
      %v2233 = vmul.f32 %v1691, %v2149
      %v2234 = vmul.f32 %v1696, %v2151
      %v2235 = vmul.f32 %v1699, %v2153
      %v2236 = vmul.f32 %v1704, %v2155
      %v2237 = vmul.f32 %v1707, %v2157
      %v2238 = vmul.f32 %v1712, %v2159
      %v2239 = vmul.f32 %v1715, %v2161
      %v2240 = vmul.f32 %v1720, %v2163
      %v2241 = vmul.f32 %v1723, %v2165
      %v2242 = vmul.f32 %v1728, %v2167
      %v2243 = vmul.f32 %v1731, %v2169
      %v2244 = vmul.f32 %v1736, %v2171
      %v2245 = vmul.f32 %v1739, %v2173
      %v2246 = vmul.f32 %v1744, %v2175
      %v2247 = vmul.f32 %v1747, %v2177
      %v2248 = vmul.f32 %v1752, %v2179
      %v2249 = vmul.f32 %v1755, %v2181
      %v2250 = vmul.f32 %v1760, %v2183
      %v2251 = vmul.f32 %v1763, %v2185
      %v2252 = vmul.f32 %v1768, %v2187
      %v2253 = vmul.f32 %v1771, %v2189
      %2255 = vset.pattern.permute.xlu0 0
      %2256 = vperm.xlu0 %2255, %v2062
      %v2257 = vpop.permute.xlu0 %2256
      %2260 = vset.pattern.permute.xlu0 0
      %2261 = vperm.xlu0 %2260, %v2063
      %v2262 = vpop.permute.xlu0 %2261
      %2265 = vset.pattern.permute.xlu0 0
      %2266 = vperm.xlu0 %2265, %v2064
      %v2267 = vpop.permute.xlu0 %2266
      %2270 = vset.pattern.permute.xlu0 0
      %2271 = vperm.xlu0 %2270, %v2065
      %v2272 = vpop.permute.xlu0 %2271
      %2275 = vset.pattern.permute.xlu0 0
      %2276 = vperm.xlu0 %2275, %v2066
      %v2277 = vpop.permute.xlu0 %2276
      %2280 = vset.pattern.permute.xlu0 0
      %2281 = vperm.xlu0 %2280, %v2067
      %v2282 = vpop.permute.xlu0 %2281
      %2285 = vset.pattern.permute.xlu0 0
      %2286 = vperm.xlu0 %2285, %v2068
      %v2287 = vpop.permute.xlu0 %2286
      %2290 = vset.pattern.permute.xlu0 0
      %2291 = vperm.xlu0 %2290, %v2069
      %v2292 = vpop.permute.xlu0 %2291
      %2295 = vset.pattern.permute.xlu0 0
      %2296 = vperm.xlu0 %2295, %v2070
      %v2297 = vpop.permute.xlu0 %2296
      %2300 = vset.pattern.permute.xlu0 0
      %2301 = vperm.xlu0 %2300, %v2071
      %v2302 = vpop.permute.xlu0 %2301
      %2305 = vset.pattern.permute.xlu0 0
      %2306 = vperm.xlu0 %2305, %v2072
      %v2307 = vpop.permute.xlu0 %2306
      %2310 = vset.pattern.permute.xlu0 0
      %2311 = vperm.xlu0 %2310, %v2073
      %v2312 = vpop.permute.xlu0 %2311
      %2315 = vset.pattern.permute.xlu0 0
      %2316 = vperm.xlu0 %2315, %v2074
      %v2317 = vpop.permute.xlu0 %2316
      %2320 = vset.pattern.permute.xlu0 0
      %2321 = vperm.xlu0 %2320, %v2075
      %v2322 = vpop.permute.xlu0 %2321
      %2325 = vset.pattern.permute.xlu0 0
      %2326 = vperm.xlu0 %2325, %v2076
      %v2327 = vpop.permute.xlu0 %2326
      %2330 = vset.pattern.permute.xlu0 0
      %2331 = vperm.xlu0 %2330, %v2077
      %v2332 = vpop.permute.xlu0 %2331
      %2335 = vset.pattern.permute.xlu0 0
      %2336 = vperm.xlu0 %2335, %v2078
      %v2337 = vpop.permute.xlu0 %2336
      %2340 = vset.pattern.permute.xlu0 0
      %2341 = vperm.xlu0 %2340, %v2079
      %v2342 = vpop.permute.xlu0 %2341
      %2345 = vset.pattern.permute.xlu0 0
      %2346 = vperm.xlu0 %2345, %v2080
      %v2347 = vpop.permute.xlu0 %2346
      %2350 = vset.pattern.permute.xlu0 0
      %2351 = vperm.xlu0 %2350, %v2081
      %v2352 = vpop.permute.xlu0 %2351
      %2355 = vset.pattern.permute.xlu0 0
      %2356 = vperm.xlu0 %2355, %v2082
      %v2357 = vpop.permute.xlu0 %2356
      %2360 = vset.pattern.permute.xlu0 0
      %2361 = vperm.xlu0 %2360, %v2083
      %v2362 = vpop.permute.xlu0 %2361
      %2365 = vset.pattern.permute.xlu0 0
      %2366 = vperm.xlu0 %2365, %v2084
      %v2367 = vpop.permute.xlu0 %2366
      %2370 = vset.pattern.permute.xlu0 0
      %2371 = vperm.xlu0 %2370, %v2085
      %v2372 = vpop.permute.xlu0 %2371
      %2375 = vset.pattern.permute.xlu0 0
      %2376 = vperm.xlu0 %2375, %v2086
      %v2377 = vpop.permute.xlu0 %2376
      %2380 = vset.pattern.permute.xlu0 0
      %2381 = vperm.xlu0 %2380, %v2087
      %v2382 = vpop.permute.xlu0 %2381
      %2385 = vset.pattern.permute.xlu0 0
      %2386 = vperm.xlu0 %2385, %v2088
      %v2387 = vpop.permute.xlu0 %2386
      %2390 = vset.pattern.permute.xlu0 0
      %2391 = vperm.xlu0 %2390, %v2089
      %v2392 = vpop.permute.xlu0 %2391
      %2395 = vset.pattern.permute.xlu0 0
      %2396 = vperm.xlu0 %2395, %v2090
      %v2397 = vpop.permute.xlu0 %2396
      %2400 = vset.pattern.permute.xlu0 0
      %2401 = vperm.xlu0 %2400, %v2091
      %v2402 = vpop.permute.xlu0 %2401
      %2405 = vset.pattern.permute.xlu0 0
      %2406 = vperm.xlu0 %2405, %v2092
      %v2407 = vpop.permute.xlu0 %2406
      %2410 = vset.pattern.permute.xlu0 0
      %2411 = vperm.xlu0 %2410, %v2093
      %v2412 = vpop.permute.xlu0 %2411
      %v2414 = vmul.f32 %v2222, %v2257
      %v2415 = vmul.f32 %v2223, %v2262
      %v2416 = vmul.f32 %v2224, %v2267
      %v2417 = vmul.f32 %v2225, %v2272
      %v2418 = vmul.f32 %v2226, %v2277
      %v2419 = vmul.f32 %v2227, %v2282
      %v2420 = vmul.f32 %v2228, %v2287
      %v2421 = vmul.f32 %v2229, %v2292
      %v2422 = vmul.f32 %v2230, %v2297
      %v2423 = vmul.f32 %v2231, %v2302
      %v2424 = vmul.f32 %v2232, %v2307
      %v2425 = vmul.f32 %v2233, %v2312
      %v2426 = vmul.f32 %v2234, %v2317
      %v2427 = vmul.f32 %v2235, %v2322
      %v2428 = vmul.f32 %v2236, %v2327
      %v2429 = vmul.f32 %v2237, %v2332
      %v2430 = vmul.f32 %v2238, %v2337
      %v2431 = vmul.f32 %v2239, %v2342
      %v2432 = vmul.f32 %v2240, %v2347
      %v2433 = vmul.f32 %v2241, %v2352
      %v2434 = vmul.f32 %v2242, %v2357
      %v2435 = vmul.f32 %v2243, %v2362
      %v2436 = vmul.f32 %v2244, %v2367
      %v2437 = vmul.f32 %v2245, %v2372
      %v2438 = vmul.f32 %v2246, %v2377
      %v2439 = vmul.f32 %v2247, %v2382
      %v2440 = vmul.f32 %v2248, %v2387
      %v2441 = vmul.f32 %v2249, %v2392
      %v2442 = vmul.f32 %v2250, %v2397
      %v2443 = vmul.f32 %v2251, %v2402
      %v2444 = vmul.f32 %v2252, %v2407
      %v2445 = vmul.f32 %v2253, %v2412
      %2446 = vst.msk [vmem:[%s351] sm:$0xff] %vm748, %v2414
      %2447 = vst.msk [vmem:[%s351 + $0x8] sm:$0xff] %vm748, %v2415
      %2448 = vst.msk [vmem:[%s351 + $0x10] sm:$0xff] %vm748, %v2416
      %2449 = vst.msk [vmem:[%s351 + $0x18] sm:$0xff] %vm748, %v2417
      %2450 = vst.msk [vmem:[%s351 + $0x20] sm:$0xff] %vm748, %v2418
      %2451 = vst.msk [vmem:[%s351 + $0x28] sm:$0xff] %vm748, %v2419
      %2452 = vst.msk [vmem:[%s351 + $0x30] sm:$0xff] %vm748, %v2420
      %2453 = vst.msk [vmem:[%s351 + $0x38] sm:$0xff] %vm748, %v2421
      %2454 = vst.msk [vmem:[%s351 + $0x40] sm:$0xff] %vm748, %v2422
      %2455 = vst.msk [vmem:[%s351 + $0x48] sm:$0xff] %vm748, %v2423
      %2456 = vst.msk [vmem:[%s351 + $0x50] sm:$0xff] %vm748, %v2424
      %2457 = vst.msk [vmem:[%s351 + $0x58] sm:$0xff] %vm748, %v2425
      %2458 = vst.msk [vmem:[%s351 + $0x60] sm:$0xff] %vm748, %v2426
      %2459 = vst.msk [vmem:[%s351 + $0x68] sm:$0xff] %vm748, %v2427
      %2460 = vst.msk [vmem:[%s351 + $0x70] sm:$0xff] %vm748, %v2428
      %2461 = vst.msk [vmem:[%s351 + $0x78] sm:$0xff] %vm748, %v2429
      %2462 = vst.msk [vmem:[%s351 + $0x80] sm:$0xff] %vm748, %v2430
      %2463 = vst.msk [vmem:[%s351 + $0x88] sm:$0xff] %vm748, %v2431
      %2464 = vst.msk [vmem:[%s351 + $0x90] sm:$0xff] %vm748, %v2432
      %2465 = vst.msk [vmem:[%s351 + $0x98] sm:$0xff] %vm748, %v2433
      %2466 = vst.msk [vmem:[%s351 + $0xa0] sm:$0xff] %vm748, %v2434
      %2467 = vst.msk [vmem:[%s351 + $0xa8] sm:$0xff] %vm748, %v2435
      %2468 = vst.msk [vmem:[%s351 + $0xb0] sm:$0xff] %vm748, %v2436
      %2469 = vst.msk [vmem:[%s351 + $0xb8] sm:$0xff] %vm748, %v2437
      %2470 = vst.msk [vmem:[%s351 + $0xc0] sm:$0xff] %vm748, %v2438
      %2471 = vst.msk [vmem:[%s351 + $0xc8] sm:$0xff] %vm748, %v2439
      %2472 = vst.msk [vmem:[%s351 + $0xd0] sm:$0xff] %vm748, %v2440
      %2473 = vst.msk [vmem:[%s351 + $0xd8] sm:$0xff] %vm748, %v2441
      %2474 = vst.msk [vmem:[%s351 + $0xe0] sm:$0xff] %vm748, %v2442
      %2475 = vst.msk [vmem:[%s351 + $0xe8] sm:$0xff] %vm748, %v2443
      %2476 = vst.msk [vmem:[%s351 + $0xf0] sm:$0xff] %vm748, %v2444
      %2477 = vst.msk [vmem:[%s351 + $0xf8] sm:$0xff] %vm748, %v2445
      %s2478 = smul.u32 32, %s19
      %p2479 = scmp.lt.s32.totalorder %s2478, 63
      %s2480 = scalar_select %p2479, %s2478, 63
      %s2481 = smul.addr %s2480, 8
      %s2482 = scalar_lea.vmem %s8, %s2481
      // Predicated region
      $region53: #{interaction_forward.2} parent=51 // pred_check
        %p2483 = pneg %p220
      $region54: #{interaction_forward.2} parent=51 // pred_check_branch
        %2485 = sbr.rel (%p2483) target = $region56
      $region55: #{interaction_forward.2} parent=51 // pred_region
        %s2486 = smul.u32 32, %s19
      $region56: #{interaction_forward.2} parent=51 // pred_fallthru
        _
    $region52: #{interaction_forward.2} parent=5 // pred_fallthru
      _
    %p2487 = scmp.le.s32.totalorder 2, %s14
    // Predicated region
    $region57: #{interaction_forward.2} parent=5 // pred_check
      %p2488 = pneg %p2487
    $region58: #{interaction_forward.2} parent=5 // pred_check_branch
      %2490 = sbr.rel (%p2488) target = $region60
    $region59: #{interaction_forward.2} parent=5 // pred_region
      %s2491 = ssub.s32 %s14, 2
      // Predicated region
      $region61: #{interaction_forward.2} parent=59 // pred_check
        %p2492 = pneg %p226
      $region62: #{interaction_forward.2} parent=59 // pred_check_branch
        %2494 = sbr.rel (%p2492) target = $region64
      $region63: #{interaction_forward.2} parent=59 // pred_region
        %s2495 = smul.u32 32, %s20
        %p2496 = scmp.lt.s32.totalorder %s2495, 63
        %s2497 = scalar_select %p2496, %s2495, 63
        %s2498 = smul.addr %s2497, 8
        %s2499 = scalar_lea.vmem %s8, %s2498
      $region64: #{interaction_forward.2} parent=59 // pred_fallthru
        _
    $region60: #{interaction_forward.2} parent=5 // pred_fallthru
      _
  $region6: #{interaction_forward.2} parent=0 // loop_footer
    %s18 = sadd.s32 1, %s14
  $region7: #{interaction_forward.2} parent=0 // loop_footer_branch
    %13 = sbr.rel target = $region3
  $region8: #{interaction_forward.2} parent=0 // loop_exit
    _

</llo_original>
